<compile_context>
chip_gen: v7x
topology: tpu7x:2x2x1
jax: 0.10.0
libtpu: 0.0.40
codegen_flags: <defaults>
</compile_context>

<pallas_src>
import jax
import jax.numpy as jnp
from jax import lax
from jax.experimental import pallas as pl
from jax.experimental.pallas import tpu as pltpu


def _pick_bt(n):
    """Batch tile: multiple of 128 (lane width). Large enough to amortize the
    per-grid-step overhead, small enough to (a) not waste lanes on tiny
    batches, (b) keep >=2 grid steps for 2-TC sharding when possible, and
    (c) keep the per-pool-row accumulators comfortably inside the vreg file."""
    cap = max(128, n // 2)
    for bt in (512, 256, 128):
        if bt <= cap:
            return bt
    return 128


def net_kernel(x_ref, cw_ref, cb_ref, fw_ref, fb_ref, out_ref, xsh_ref, acc_ref):
    # x_ref  : (1, 4, 16, 16, BT) VMEM  pool-phase planes, batch on lanes:
    #            x_ref[0, pr*2+pc, r, c, b] = img[b, 2r+pr, 2c+pc]
    # cw_ref : (27,) SMEM  conv weight, idx = c*9 + ki*3 + kj
    # cb_ref : (3,)  SMEM  conv bias
    # fw_ref : (10, 720) VMEM  fc weight in (c, ph, pw16) order, pw=15 col == 0
    # fb_ref : (10, BT)  VMEM  fc bias, lane-broadcast
    # out_ref: (10, BT)  VMEM
    # xsh_ref: (4, 16, 16, BT) VMEM scratch  +1-column-shifted phase planes
    # acc_ref: (45, 16, BT)    VMEM scratch  pooled activations,
    #            row = c*15 + ph, sublane = pw (pw=15 is a pad column)
    bt = x_ref.shape[-1]

    # --- one-time (per grid step) shifted copies of the 4 phase planes ------
    # xsh[p, r, pw, b] = phase[p][r, pw+1, b], so every window slab read in the
    # hot loop below starts at sublane 0 (aligned).  The pw=15 pad column only
    # ever reaches the zero pad column of the FC weight, but it must be FINITE
    # (scratch VMEM is uninitialized), hence the explicit small zero store.
    zero_col = jnp.zeros((16, 1, bt), jnp.float32)
    for p in range(4):
        xsh_ref[p, :, 0:15, :] = x_ref[0, p, :, 1:16, :]
        xsh_ref[p, :, 15:16, :] = zero_col

    # Conv parameters as SMEM scalars (no lane-broadcast vreg loads).
    w = [[cw_ref[c * 9 + t] for t in range(9)] for c in range(3)]
    bias = [cb_ref[c] for c in range(3)]

    def slab(r0, c0, ph):
        # (16, BT) row slab: slab[pw, b] = img[b, 2*ph + r0, 2*pw + c0]
        p = (r0 % 2) * 2 + (c0 % 2)
        r = ph + r0 // 2
        if c0 < 2:
            return x_ref[0, p, r]       # aligned (16, BT) load
        return xsh_ref[p, r]            # pre-shifted, aligned (16, BT) load

    # --- fused conv + bias + ReLU + 2x2 max-pool, one pool row per iteration -
    # Each window slab is loaded once per (pool position, tap) and reused for
    # all 3 output channels, keeping the live set small (no spills) and cutting
    # VMEM vld traffic ~3x vs. per-channel reloads.
    def pool_row(ph, carry):
        pooled = [None, None, None]
        for di in range(2):                         # pool positions
            for dj in range(2):
                z = [None, None, None]
                for ki in range(3):                 # conv taps
                    for kj in range(3):
                        s = slab(di + ki, dj + kj, ph)   # ONE load, 3 uses
                        t = ki * 3 + kj
                        for c in range(3):
                            prod = s * w[c][t]           # scalar x vector (VPU)
                            z[c] = prod if z[c] is None else z[c] + prod
                for c in range(3):
                    zc = jnp.maximum(z[c] + bias[c], 0.0)        # bias + ReLU
                    pooled[c] = zc if pooled[c] is None else jnp.maximum(pooled[c], zc)
        for c in range(3):
            acc_ref[c * 15 + ph] = pooled[c]        # full (16, BT) aligned store
        return carry

    lax.fori_loop(0, 15, pool_row, 0)

    # --- FC: single lane-dense MXU matmul, batch stays on the lane axis ------
    # acc is fully rewritten above with finite values each step, so no scratch
    # zeroing is needed; the pw=15 pad rows of `flat` meet zero FC weights.
    flat = acc_ref[...].reshape(45 * 16, bt)        # (720, BT), layout-trivial
    out_ref[...] = (jnp.dot(fw_ref[...], flat,
                            preferred_element_type=jnp.float32)
                    + fb_ref[...])


def net_forward(x, conv_w, conv_b, fc_w, fc_b, *, bt=None):
    N = x.shape[0]
    assert x.shape[1:] == (1, 32, 32)
    xs = x[:, 0].astype(jnp.float32)                              # (N, 32, 32)

    BT = _pick_bt(N) if bt is None else bt
    n_pad = pl.cdiv(N, BT) * BT
    n_tiles = n_pad // BT
    if n_pad != N:
        xs = jnp.pad(xs, ((0, n_pad - N), (0, 0), (0, 0)))

    # Phase-decompose for the 2x2 pool, batch on the lane axis, and make each
    # grid-step block a single contiguous HBM region:
    #   xph[t, pr*2+pc, r, c, b] = xs[t*BT + b, 2r+pr, 2c+pc]
    xph = xs.reshape(n_tiles, BT, 16, 2, 16, 2).transpose(0, 3, 5, 2, 4, 1)
    xph = xph.reshape(n_tiles, 4, 16, 16, BT)

    cw = conv_w.reshape(27).astype(jnp.float32)                   # SMEM scalars
    cb = conv_b.reshape(3).astype(jnp.float32)

    # FC weight: (10, 675) -> (10, 3, 15, 15) -> zero-pad pw 15->16 -> (10, 720),
    # matching the kernel's c*240 + ph*16 + pw flatten order (torch (c,h,w)
    # order plus a zeroed pad column).
    fw = fc_w.reshape(10, 3, 15, 15).astype(jnp.float32)
    fw = jnp.concatenate([fw, jnp.zeros((10, 3, 15, 1), jnp.float32)], axis=-1)
    fwk = fw.reshape(10, 720)
    fbb = jnp.tile(fc_b.reshape(10, 1).astype(jnp.float32), (1, BT))  # (10, BT)

    out = pl.pallas_call(
        net_kernel,
        out_shape=jax.ShapeDtypeStruct((10, n_pad), jnp.float32),
        grid=(n_tiles,),
        in_specs=[
            pl.BlockSpec((1, 4, 16, 16, BT), lambda n: (n, 0, 0, 0, 0)),
            pl.BlockSpec(memory_space=pltpu.MemorySpace.SMEM),
            pl.BlockSpec(memory_space=pltpu.MemorySpace.SMEM),
            pl.BlockSpec((10, 720), lambda n: (0, 0)),
            pl.BlockSpec((10, BT), lambda n: (0, 0)),
        ],
        out_specs=pl.BlockSpec((10, BT), lambda n: (0, n)),
        scratch_shapes=[
            pltpu.VMEM((4, 16, 16, BT), jnp.float32),   # shifted phase planes
            pltpu.VMEM((45, 16, BT), jnp.float32),      # pooled activations
        ],
        compiler_params=pltpu.CompilerParams(
            dimension_semantics=("parallel",),
            vmem_limit_bytes=48 * 1024 * 1024),
    )(xph, cw, cb, fwk, fbb)

    return out[:, :N].T                                           # (N, 10)


def net_reference(x, conv_w, conv_b, fc_w, fc_b):
    # Pure-JAX reference matching PyTorch semantics (for correctness check).
    z = jax.lax.conv_general_dilated(
        x, conv_w, window_strides=(1, 1), padding="VALID",
        dimension_numbers=("NCHW", "OIHW", "NCHW"))
    z = z + conv_b.reshape(1, 3, 1, 1)
    z = jnp.maximum(z, 0.0)
    z = jax.lax.reduce_window(z, -jnp.inf, jax.lax.max,
                              (1, 1, 2, 2), (1, 1, 2, 2), "VALID")
    z = z.reshape(x.shape[0], -1)                                 # (N, 675)
    return z @ fc_w.T + fc_b


if __name__ == "__main__":
    key = jax.random.PRNGKey(0)
    kx, k1, k2, k3, k4 = jax.random.split(key, 5)

    N = 2
    x = jax.random.normal(kx, (N, 1, 32, 32), jnp.float32)

    # Deterministic synthetic parameters (shapes from Net.__init__).
    conv_w = jax.random.normal(k1, (3, 1, 3, 3), jnp.float32) * 0.1
    conv_b = jax.random.normal(k2, (3,), jnp.float32) * 0.1
    fc_w = jax.random.normal(k3, (10, 675), jnp.float32) * 0.05
    fc_b = jax.random.normal(k4, (10,), jnp.float32) * 0.05

    out = net_forward(x, conv_w, conv_b, fc_w, fc_b)
    out = jax.block_until_ready(out)

    ref = net_reference(x, conv_w, conv_b, fc_w, fc_b)
    assert out.shape == (N, 10)
    assert jnp.allclose(out, ref, atol=1e-2, rtol=1e-2), (out, ref)

    print("KERNEL_OK")
</pallas_src>

<mosaic_0001>
module attributes {stable_mosaic.version = 11 : i64} {
  func.func @net_kernel(%arg0: i32, %arg1: memref<1x4x16x16x128xf32, #tpu.memory_space<vmem>>, %arg2: memref<27xf32, #tpu.memory_space<smem>>, %arg3: memref<3xf32, #tpu.memory_space<smem>>, %arg4: memref<10x720xf32, #tpu.memory_space<vmem>>, %arg5: memref<10x128xf32, #tpu.memory_space<vmem>>, %arg6: memref<10x128xf32, #tpu.memory_space<vmem>>, %arg7: memref<4x16x16x128xf32, #tpu.memory_space<vmem>>, %arg8: memref<45x16x128xf32, #tpu.memory_space<vmem>>) attributes {dimension_semantics = [#tpu.dimension_semantics<parallel>], iteration_bounds = array<i64: 1>, scalar_prefetch = 0 : i64, scratch_operands = 2 : i64, tpu.core_type = #tpu.core_type<tc>, window_params = [{transform_indices = @transform_0, window_bounds = array<i64: 1, 4, 16, 16, 128>}, {transform_indices = @transform_1, window_bounds = array<i64: 27>}, {transform_indices = @transform_2, window_bounds = array<i64: 3>}, {pipeline_mode = #tpu.pipeline_mode<synchronous>, transform_indices = @transform_3, window_bounds = array<i64: 10, 720>}, {pipeline_mode = #tpu.pipeline_mode<synchronous>, transform_indices = @transform_4, window_bounds = array<i64: 10, 128>}, {transform_indices = @transform_5, window_bounds = array<i64: 10, 128>}]} {
    %cst = arith.constant 0.000000e+00 : f32
    %0 = vector.broadcast %cst : f32 to vector<16x1x128xf32>
    %c0 = arith.constant 0 : index
    %c0_0 = arith.constant 0 : index
    %c0_1 = arith.constant 0 : index
    %c1 = arith.constant 1 : index
    %c0_2 = arith.constant 0 : index
    %1 = vector.load %arg1[%c0, %c0_0, %c0_1, %c1, %c0_2] : memref<1x4x16x16x128xf32, #tpu.memory_space<vmem>>, vector<1x1x16x15x128xf32>
    %2 = vector.shape_cast %1 : vector<1x1x16x15x128xf32> to vector<16x15x128xf32>
    %c0_3 = arith.constant 0 : index
    %c0_4 = arith.constant 0 : index
    %c0_5 = arith.constant 0 : index
    %c0_6 = arith.constant 0 : index
    %3 = vector.load %arg7[%c0_3, %c0_4, %c0_5, %c0_6] : memref<4x16x16x128xf32, #tpu.memory_space<vmem>>, vector<1x16x15x128xf32>
    %4 = vector.shape_cast %3 : vector<1x16x15x128xf32> to vector<16x15x128xf32>
    %5 = vector.shape_cast %2 : vector<16x15x128xf32> to vector<1x16x15x128xf32>
    tpu.vector_store %arg7[%c0_3, %c0_4, %c0_5, %c0_6], %5 {strides = array<i32>} : memref<4x16x16x128xf32, #tpu.memory_space<vmem>>, vector<1x16x15x128xf32>,
    %c0_7 = arith.constant 0 : index
    %c0_8 = arith.constant 0 : index
    %c15 = arith.constant 15 : index
    %c0_9 = arith.constant 0 : index
    %6 = vector.load %arg7[%c0_7, %c0_8, %c15, %c0_9] : memref<4x16x16x128xf32, #tpu.memory_space<vmem>>, vector<1x16x1x128xf32>
    %7 = vector.shape_cast %6 : vector<1x16x1x128xf32> to vector<16x1x128xf32>
    %8 = vector.shape_cast %0 : vector<16x1x128xf32> to vector<1x16x1x128xf32>
    tpu.vector_store %arg7[%c0_7, %c0_8, %c15, %c0_9], %8 {strides = array<i32>} : memref<4x16x16x128xf32, #tpu.memory_space<vmem>>, vector<1x16x1x128xf32>,
    %c0_10 = arith.constant 0 : index
    %c1_11 = arith.constant 1 : index
    %c0_12 = arith.constant 0 : index
    %c1_13 = arith.constant 1 : index
    %c0_14 = arith.constant 0 : index
    %9 = vector.load %arg1[%c0_10, %c1_11, %c0_12, %c1_13, %c0_14] : memref<1x4x16x16x128xf32, #tpu.memory_space<vmem>>, vector<1x1x16x15x128xf32>
    %10 = vector.shape_cast %9 : vector<1x1x16x15x128xf32> to vector<16x15x128xf32>
    %c1_15 = arith.constant 1 : index
    %c0_16 = arith.constant 0 : index
    %c0_17 = arith.constant 0 : index
    %c0_18 = arith.constant 0 : index
    %11 = vector.load %arg7[%c1_15, %c0_16, %c0_17, %c0_18] : memref<4x16x16x128xf32, #tpu.memory_space<vmem>>, vector<1x16x15x128xf32>
    %12 = vector.shape_cast %11 : vector<1x16x15x128xf32> to vector<16x15x128xf32>
    %13 = vector.shape_cast %10 : vector<16x15x128xf32> to vector<1x16x15x128xf32>
    tpu.vector_store %arg7[%c1_15, %c0_16, %c0_17, %c0_18], %13 {strides = array<i32>} : memref<4x16x16x128xf32, #tpu.memory_space<vmem>>, vector<1x16x15x128xf32>,
    %c1_19 = arith.constant 1 : index
    %c0_20 = arith.constant 0 : index
    %c15_21 = arith.constant 15 : index
    %c0_22 = arith.constant 0 : index
    %14 = vector.load %arg7[%c1_19, %c0_20, %c15_21, %c0_22] : memref<4x16x16x128xf32, #tpu.memory_space<vmem>>, vector<1x16x1x128xf32>
    %15 = vector.shape_cast %14 : vector<1x16x1x128xf32> to vector<16x1x128xf32>
    %16 = vector.shape_cast %0 : vector<16x1x128xf32> to vector<1x16x1x128xf32>
    tpu.vector_store %arg7[%c1_19, %c0_20, %c15_21, %c0_22], %16 {strides = array<i32>} : memref<4x16x16x128xf32, #tpu.memory_space<vmem>>, vector<1x16x1x128xf32>,
    %c0_23 = arith.constant 0 : index
    %c2 = arith.constant 2 : index
    %c0_24 = arith.constant 0 : index
    %c1_25 = arith.constant 1 : index
    %c0_26 = arith.constant 0 : index
    %17 = vector.load %arg1[%c0_23, %c2, %c0_24, %c1_25, %c0_26] : memref<1x4x16x16x128xf32, #tpu.memory_space<vmem>>, vector<1x1x16x15x128xf32>
    %18 = vector.shape_cast %17 : vector<1x1x16x15x128xf32> to vector<16x15x128xf32>
    %c2_27 = arith.constant 2 : index
    %c0_28 = arith.constant 0 : index
    %c0_29 = arith.constant 0 : index
    %c0_30 = arith.constant 0 : index
    %19 = vector.load %arg7[%c2_27, %c0_28, %c0_29, %c0_30] : memref<4x16x16x128xf32, #tpu.memory_space<vmem>>, vector<1x16x15x128xf32>
    %20 = vector.shape_cast %19 : vector<1x16x15x128xf32> to vector<16x15x128xf32>
    %21 = vector.shape_cast %18 : vector<16x15x128xf32> to vector<1x16x15x128xf32>
    tpu.vector_store %arg7[%c2_27, %c0_28, %c0_29, %c0_30], %21 {strides = array<i32>} : memref<4x16x16x128xf32, #tpu.memory_space<vmem>>, vector<1x16x15x128xf32>,
    %c2_31 = arith.constant 2 : index
    %c0_32 = arith.constant 0 : index
    %c15_33 = arith.constant 15 : index
    %c0_34 = arith.constant 0 : index
    %22 = vector.load %arg7[%c2_31, %c0_32, %c15_33, %c0_34] : memref<4x16x16x128xf32, #tpu.memory_space<vmem>>, vector<1x16x1x128xf32>
    %23 = vector.shape_cast %22 : vector<1x16x1x128xf32> to vector<16x1x128xf32>
    %24 = vector.shape_cast %0 : vector<16x1x128xf32> to vector<1x16x1x128xf32>
    tpu.vector_store %arg7[%c2_31, %c0_32, %c15_33, %c0_34], %24 {strides = array<i32>} : memref<4x16x16x128xf32, #tpu.memory_space<vmem>>, vector<1x16x1x128xf32>,
    %c0_35 = arith.constant 0 : index
    %c3 = arith.constant 3 : index
    %c0_36 = arith.constant 0 : index
    %c1_37 = arith.constant 1 : index
    %c0_38 = arith.constant 0 : index
    %25 = vector.load %arg1[%c0_35, %c3, %c0_36, %c1_37, %c0_38] : memref<1x4x16x16x128xf32, #tpu.memory_space<vmem>>, vector<1x1x16x15x128xf32>
    %26 = vector.shape_cast %25 : vector<1x1x16x15x128xf32> to vector<16x15x128xf32>
    %c3_39 = arith.constant 3 : index
    %c0_40 = arith.constant 0 : index
    %c0_41 = arith.constant 0 : index
    %c0_42 = arith.constant 0 : index
    %27 = vector.load %arg7[%c3_39, %c0_40, %c0_41, %c0_42] : memref<4x16x16x128xf32, #tpu.memory_space<vmem>>, vector<1x16x15x128xf32>
    %28 = vector.shape_cast %27 : vector<1x16x15x128xf32> to vector<16x15x128xf32>
    %29 = vector.shape_cast %26 : vector<16x15x128xf32> to vector<1x16x15x128xf32>
    tpu.vector_store %arg7[%c3_39, %c0_40, %c0_41, %c0_42], %29 {strides = array<i32>} : memref<4x16x16x128xf32, #tpu.memory_space<vmem>>, vector<1x16x15x128xf32>,
    %c3_43 = arith.constant 3 : index
    %c0_44 = arith.constant 0 : index
    %c15_45 = arith.constant 15 : index
    %c0_46 = arith.constant 0 : index
    %30 = vector.load %arg7[%c3_43, %c0_44, %c15_45, %c0_46] : memref<4x16x16x128xf32, #tpu.memory_space<vmem>>, vector<1x16x1x128xf32>
    %31 = vector.shape_cast %30 : vector<1x16x1x128xf32> to vector<16x1x128xf32>
    %32 = vector.shape_cast %0 : vector<16x1x128xf32> to vector<1x16x1x128xf32>
    tpu.vector_store %arg7[%c3_43, %c0_44, %c15_45, %c0_46], %32 {strides = array<i32>} : memref<4x16x16x128xf32, #tpu.memory_space<vmem>>, vector<1x16x1x128xf32>,
    %c0_47 = arith.constant 0 : index
    %33 = memref.load %arg2[%c0_47] : memref<27xf32, #tpu.memory_space<smem>>
    %c1_48 = arith.constant 1 : index
    %34 = memref.load %arg2[%c1_48] : memref<27xf32, #tpu.memory_space<smem>>
    %c2_49 = arith.constant 2 : index
    %35 = memref.load %arg2[%c2_49] : memref<27xf32, #tpu.memory_space<smem>>
    %c3_50 = arith.constant 3 : index
    %36 = memref.load %arg2[%c3_50] : memref<27xf32, #tpu.memory_space<smem>>
    %c4 = arith.constant 4 : index
    %37 = memref.load %arg2[%c4] : memref<27xf32, #tpu.memory_space<smem>>
    %c5 = arith.constant 5 : index
    %38 = memref.load %arg2[%c5] : memref<27xf32, #tpu.memory_space<smem>>
    %c6 = arith.constant 6 : index
    %39 = memref.load %arg2[%c6] : memref<27xf32, #tpu.memory_space<smem>>
    %c7 = arith.constant 7 : index
    %40 = memref.load %arg2[%c7] : memref<27xf32, #tpu.memory_space<smem>>
    %c8 = arith.constant 8 : index
    %41 = memref.load %arg2[%c8] : memref<27xf32, #tpu.memory_space<smem>>
    %c9 = arith.constant 9 : index
    %42 = memref.load %arg2[%c9] : memref<27xf32, #tpu.memory_space<smem>>
    %c10 = arith.constant 10 : index
    %43 = memref.load %arg2[%c10] : memref<27xf32, #tpu.memory_space<smem>>
    %c11 = arith.constant 11 : index
    %44 = memref.load %arg2[%c11] : memref<27xf32, #tpu.memory_space<smem>>
    %c12 = arith.constant 12 : index
    %45 = memref.load %arg2[%c12] : memref<27xf32, #tpu.memory_space<smem>>
    %c13 = arith.constant 13 : index
    %46 = memref.load %arg2[%c13] : memref<27xf32, #tpu.memory_space<smem>>
    %c14 = arith.constant 14 : index
    %47 = memref.load %arg2[%c14] : memref<27xf32, #tpu.memory_space<smem>>
    %c15_51 = arith.constant 15 : index
    %48 = memref.load %arg2[%c15_51] : memref<27xf32, #tpu.memory_space<smem>>
    %c16 = arith.constant 16 : index
    %49 = memref.load %arg2[%c16] : memref<27xf32, #tpu.memory_space<smem>>
    %c17 = arith.constant 17 : index
    %50 = memref.load %arg2[%c17] : memref<27xf32, #tpu.memory_space<smem>>
    %c18 = arith.constant 18 : index
    %51 = memref.load %arg2[%c18] : memref<27xf32, #tpu.memory_space<smem>>
    %c19 = arith.constant 19 : index
    %52 = memref.load %arg2[%c19] : memref<27xf32, #tpu.memory_space<smem>>
    %c20 = arith.constant 20 : index
    %53 = memref.load %arg2[%c20] : memref<27xf32, #tpu.memory_space<smem>>
    %c21 = arith.constant 21 : index
    %54 = memref.load %arg2[%c21] : memref<27xf32, #tpu.memory_space<smem>>
    %c22 = arith.constant 22 : index
    %55 = memref.load %arg2[%c22] : memref<27xf32, #tpu.memory_space<smem>>
    %c23 = arith.constant 23 : index
    %56 = memref.load %arg2[%c23] : memref<27xf32, #tpu.memory_space<smem>>
    %c24 = arith.constant 24 : index
    %57 = memref.load %arg2[%c24] : memref<27xf32, #tpu.memory_space<smem>>
    %c25 = arith.constant 25 : index
    %58 = memref.load %arg2[%c25] : memref<27xf32, #tpu.memory_space<smem>>
    %c26 = arith.constant 26 : index
    %59 = memref.load %arg2[%c26] : memref<27xf32, #tpu.memory_space<smem>>
    %c0_52 = arith.constant 0 : index
    %60 = memref.load %arg3[%c0_52] : memref<3xf32, #tpu.memory_space<smem>>
    %c1_53 = arith.constant 1 : index
    %61 = memref.load %arg3[%c1_53] : memref<3xf32, #tpu.memory_space<smem>>
    %c2_54 = arith.constant 2 : index
    %62 = memref.load %arg3[%c2_54] : memref<3xf32, #tpu.memory_space<smem>>
    %c0_i32 = arith.constant 0 : i32
    %c15_i32 = arith.constant 15 : i32
    %63 = arith.addi %c0_i32, %c15_i32 : i32
    %c1_i32 = arith.constant 1 : i32
    scf.for %arg9 = %c0_i32 to %63 step %c1_i32  : i32 {
      %c0_i32_66 = arith.constant 0 : i32
      %71 = arith.addi %arg9, %c0_i32_66 : i32
      %c0_67 = arith.constant 0 : index
      %c0_68 = arith.constant 0 : index
      %72 = arith.index_cast %71 : i32 to index
      %c0_69 = arith.constant 0 : index
      %c0_70 = arith.constant 0 : index
      %73 = vector.load %arg1[%c0_67, %c0_68, %72, %c0_69, %c0_70] : memref<1x4x16x16x128xf32, #tpu.memory_space<vmem>>, vector<1x1x1x16x128xf32>
      %74 = vector.shape_cast %73 : vector<1x1x1x16x128xf32> to vector<16x128xf32>
      %75 = vector.broadcast %33 : f32 to vector<16x128xf32>
      %76 = arith.mulf %74, %75 : vector<16x128xf32>
      %77 = vector.broadcast %42 : f32 to vector<16x128xf32>
      %78 = arith.mulf %74, %77 : vector<16x128xf32>
      %79 = vector.broadcast %51 : f32 to vector<16x128xf32>
      %80 = arith.mulf %74, %79 : vector<16x128xf32>
      %c0_i32_71 = arith.constant 0 : i32
      %81 = arith.addi %arg9, %c0_i32_71 : i32
      %c0_72 = arith.constant 0 : index
      %c1_73 = arith.constant 1 : index
      %82 = arith.index_cast %81 : i32 to index
      %c0_74 = arith.constant 0 : index
      %c0_75 = arith.constant 0 : index
      %83 = vector.load %arg1[%c0_72, %c1_73, %82, %c0_74, %c0_75] : memref<1x4x16x16x128xf32, #tpu.memory_space<vmem>>, vector<1x1x1x16x128xf32>
      %84 = vector.shape_cast %83 : vector<1x1x1x16x128xf32> to vector<16x128xf32>
      %85 = vector.broadcast %34 : f32 to vector<16x128xf32>
      %86 = arith.mulf %84, %85 : vector<16x128xf32>
      %87 = arith.addf %76, %86 : vector<16x128xf32>
      %88 = vector.broadcast %43 : f32 to vector<16x128xf32>
      %89 = arith.mulf %84, %88 : vector<16x128xf32>
      %90 = arith.addf %78, %89 : vector<16x128xf32>
      %91 = vector.broadcast %52 : f32 to vector<16x128xf32>
      %92 = arith.mulf %84, %91 : vector<16x128xf32>
      %93 = arith.addf %80, %92 : vector<16x128xf32>
      %c0_i32_76 = arith.constant 0 : i32
      %94 = arith.addi %arg9, %c0_i32_76 : i32
      %c0_77 = arith.constant 0 : index
      %95 = arith.index_cast %94 : i32 to index
      %c0_78 = arith.constant 0 : index
      %c0_79 = arith.constant 0 : index
      %96 = vector.load %arg7[%c0_77, %95, %c0_78, %c0_79] : memref<4x16x16x128xf32, #tpu.memory_space<vmem>>, vector<1x1x16x128xf32>
      %97 = vector.shape_cast %96 : vector<1x1x16x128xf32> to vector<16x128xf32>
      %98 = vector.broadcast %35 : f32 to vector<16x128xf32>
      %99 = arith.mulf %97, %98 : vector<16x128xf32>
      %100 = arith.addf %87, %99 : vector<16x128xf32>
      %101 = vector.broadcast %44 : f32 to vector<16x128xf32>
      %102 = arith.mulf %97, %101 : vector<16x128xf32>
      %103 = arith.addf %90, %102 : vector<16x128xf32>
      %104 = vector.broadcast %53 : f32 to vector<16x128xf32>
      %105 = arith.mulf %97, %104 : vector<16x128xf32>
      %106 = arith.addf %93, %105 : vector<16x128xf32>
      %c0_i32_80 = arith.constant 0 : i32
      %107 = arith.addi %arg9, %c0_i32_80 : i32
      %c0_81 = arith.constant 0 : index
      %c2_82 = arith.constant 2 : index
      %108 = arith.index_cast %107 : i32 to index
      %c0_83 = arith.constant 0 : index
      %c0_84 = arith.constant 0 : index
      %109 = vector.load %arg1[%c0_81, %c2_82, %108, %c0_83, %c0_84] : memref<1x4x16x16x128xf32, #tpu.memory_space<vmem>>, vector<1x1x1x16x128xf32>
      %110 = vector.shape_cast %109 : vector<1x1x1x16x128xf32> to vector<16x128xf32>
      %111 = vector.broadcast %36 : f32 to vector<16x128xf32>
      %112 = arith.mulf %110, %111 : vector<16x128xf32>
      %113 = arith.addf %100, %112 : vector<16x128xf32>
      %114 = vector.broadcast %45 : f32 to vector<16x128xf32>
      %115 = arith.mulf %110, %114 : vector<16x128xf32>
      %116 = arith.addf %103, %115 : vector<16x128xf32>
      %117 = vector.broadcast %54 : f32 to vector<16x128xf32>
      %118 = arith.mulf %110, %117 : vector<16x128xf32>
      %119 = arith.addf %106, %118 : vector<16x128xf32>
      %c0_i32_85 = arith.constant 0 : i32
      %120 = arith.addi %arg9, %c0_i32_85 : i32
      %c0_86 = arith.constant 0 : index
      %c3_87 = arith.constant 3 : index
      %121 = arith.index_cast %120 : i32 to index
      %c0_88 = arith.constant 0 : index
      %c0_89 = arith.constant 0 : index
      %122 = vector.load %arg1[%c0_86, %c3_87, %121, %c0_88, %c0_89] : memref<1x4x16x16x128xf32, #tpu.memory_space<vmem>>, vector<1x1x1x16x128xf32>
      %123 = vector.shape_cast %122 : vector<1x1x1x16x128xf32> to vector<16x128xf32>
      %124 = vector.broadcast %37 : f32 to vector<16x128xf32>
      %125 = arith.mulf %123, %124 : vector<16x128xf32>
      %126 = arith.addf %113, %125 : vector<16x128xf32>
      %127 = vector.broadcast %46 : f32 to vector<16x128xf32>
      %128 = arith.mulf %123, %127 : vector<16x128xf32>
      %129 = arith.addf %116, %128 : vector<16x128xf32>
      %130 = vector.broadcast %55 : f32 to vector<16x128xf32>
      %131 = arith.mulf %123, %130 : vector<16x128xf32>
      %132 = arith.addf %119, %131 : vector<16x128xf32>
      %c0_i32_90 = arith.constant 0 : i32
      %133 = arith.addi %arg9, %c0_i32_90 : i32
      %c2_91 = arith.constant 2 : index
      %134 = arith.index_cast %133 : i32 to index
      %c0_92 = arith.constant 0 : index
      %c0_93 = arith.constant 0 : index
      %135 = vector.load %arg7[%c2_91, %134, %c0_92, %c0_93] : memref<4x16x16x128xf32, #tpu.memory_space<vmem>>, vector<1x1x16x128xf32>
      %136 = vector.shape_cast %135 : vector<1x1x16x128xf32> to vector<16x128xf32>
      %137 = vector.broadcast %38 : f32 to vector<16x128xf32>
      %138 = arith.mulf %136, %137 : vector<16x128xf32>
      %139 = arith.addf %126, %138 : vector<16x128xf32>
      %140 = vector.broadcast %47 : f32 to vector<16x128xf32>
      %141 = arith.mulf %136, %140 : vector<16x128xf32>
      %142 = arith.addf %129, %141 : vector<16x128xf32>
      %143 = vector.broadcast %56 : f32 to vector<16x128xf32>
      %144 = arith.mulf %136, %143 : vector<16x128xf32>
      %145 = arith.addf %132, %144 : vector<16x128xf32>
      %c1_i32_94 = arith.constant 1 : i32
      %146 = arith.addi %arg9, %c1_i32_94 : i32
      %c0_95 = arith.constant 0 : index
      %c0_96 = arith.constant 0 : index
      %147 = arith.index_cast %146 : i32 to index
      %c0_97 = arith.constant 0 : index
      %c0_98 = arith.constant 0 : index
      %148 = vector.load %arg1[%c0_95, %c0_96, %147, %c0_97, %c0_98] : memref<1x4x16x16x128xf32, #tpu.memory_space<vmem>>, vector<1x1x1x16x128xf32>
      %149 = vector.shape_cast %148 : vector<1x1x1x16x128xf32> to vector<16x128xf32>
      %150 = vector.broadcast %39 : f32 to vector<16x128xf32>
      %151 = arith.mulf %149, %150 : vector<16x128xf32>
      %152 = arith.addf %139, %151 : vector<16x128xf32>
      %153 = vector.broadcast %48 : f32 to vector<16x128xf32>
      %154 = arith.mulf %149, %153 : vector<16x128xf32>
      %155 = arith.addf %142, %154 : vector<16x128xf32>
      %156 = vector.broadcast %57 : f32 to vector<16x128xf32>
      %157 = arith.mulf %149, %156 : vector<16x128xf32>
      %158 = arith.addf %145, %157 : vector<16x128xf32>
      %c1_i32_99 = arith.constant 1 : i32
      %159 = arith.addi %arg9, %c1_i32_99 : i32
      %c0_100 = arith.constant 0 : index
      %c1_101 = arith.constant 1 : index
      %160 = arith.index_cast %159 : i32 to index
      %c0_102 = arith.constant 0 : index
      %c0_103 = arith.constant 0 : index
      %161 = vector.load %arg1[%c0_100, %c1_101, %160, %c0_102, %c0_103] : memref<1x4x16x16x128xf32, #tpu.memory_space<vmem>>, vector<1x1x1x16x128xf32>
      %162 = vector.shape_cast %161 : vector<1x1x1x16x128xf32> to vector<16x128xf32>
      %163 = vector.broadcast %40 : f32 to vector<16x128xf32>
      %164 = arith.mulf %162, %163 : vector<16x128xf32>
      %165 = arith.addf %152, %164 : vector<16x128xf32>
      %166 = vector.broadcast %49 : f32 to vector<16x128xf32>
      %167 = arith.mulf %162, %166 : vector<16x128xf32>
      %168 = arith.addf %155, %167 : vector<16x128xf32>
      %169 = vector.broadcast %58 : f32 to vector<16x128xf32>
      %170 = arith.mulf %162, %169 : vector<16x128xf32>
      %171 = arith.addf %158, %170 : vector<16x128xf32>
      %c1_i32_104 = arith.constant 1 : i32
      %172 = arith.addi %arg9, %c1_i32_104 : i32
      %c0_105 = arith.constant 0 : index
      %173 = arith.index_cast %172 : i32 to index
      %c0_106 = arith.constant 0 : index
      %c0_107 = arith.constant 0 : index
      %174 = vector.load %arg7[%c0_105, %173, %c0_106, %c0_107] : memref<4x16x16x128xf32, #tpu.memory_space<vmem>>, vector<1x1x16x128xf32>
      %175 = vector.shape_cast %174 : vector<1x1x16x128xf32> to vector<16x128xf32>
      %176 = vector.broadcast %41 : f32 to vector<16x128xf32>
      %177 = arith.mulf %175, %176 : vector<16x128xf32>
      %178 = arith.addf %165, %177 : vector<16x128xf32>
      %179 = vector.broadcast %50 : f32 to vector<16x128xf32>
      %180 = arith.mulf %175, %179 : vector<16x128xf32>
      %181 = arith.addf %168, %180 : vector<16x128xf32>
      %182 = vector.broadcast %59 : f32 to vector<16x128xf32>
      %183 = arith.mulf %175, %182 : vector<16x128xf32>
      %184 = arith.addf %171, %183 : vector<16x128xf32>
      %185 = vector.broadcast %60 : f32 to vector<16x128xf32>
      %186 = arith.addf %178, %185 : vector<16x128xf32>
      %cst_108 = arith.constant 0.000000e+00 : f32
      %187 = vector.broadcast %cst_108 : f32 to vector<16x128xf32>
      %188 = arith.maximumf %186, %187 : vector<16x128xf32>
      %189 = vector.broadcast %61 : f32 to vector<16x128xf32>
      %190 = arith.addf %181, %189 : vector<16x128xf32>
      %cst_109 = arith.constant 0.000000e+00 : f32
      %191 = vector.broadcast %cst_109 : f32 to vector<16x128xf32>
      %192 = arith.maximumf %190, %191 : vector<16x128xf32>
      %193 = vector.broadcast %62 : f32 to vector<16x128xf32>
      %194 = arith.addf %184, %193 : vector<16x128xf32>
      %cst_110 = arith.constant 0.000000e+00 : f32
      %195 = vector.broadcast %cst_110 : f32 to vector<16x128xf32>
      %196 = arith.maximumf %194, %195 : vector<16x128xf32>
      %c0_i32_111 = arith.constant 0 : i32
      %197 = arith.addi %arg9, %c0_i32_111 : i32
      %c0_112 = arith.constant 0 : index
      %c1_113 = arith.constant 1 : index
      %198 = arith.index_cast %197 : i32 to index
      %c0_114 = arith.constant 0 : index
      %c0_115 = arith.constant 0 : index
      %199 = vector.load %arg1[%c0_112, %c1_113, %198, %c0_114, %c0_115] : memref<1x4x16x16x128xf32, #tpu.memory_space<vmem>>, vector<1x1x1x16x128xf32>
      %200 = vector.shape_cast %199 : vector<1x1x1x16x128xf32> to vector<16x128xf32>
      %201 = vector.broadcast %33 : f32 to vector<16x128xf32>
      %202 = arith.mulf %200, %201 : vector<16x128xf32>
      %203 = vector.broadcast %42 : f32 to vector<16x128xf32>
      %204 = arith.mulf %200, %203 : vector<16x128xf32>
      %205 = vector.broadcast %51 : f32 to vector<16x128xf32>
      %206 = arith.mulf %200, %205 : vector<16x128xf32>
      %c0_i32_116 = arith.constant 0 : i32
      %207 = arith.addi %arg9, %c0_i32_116 : i32
      %c0_117 = arith.constant 0 : index
      %208 = arith.index_cast %207 : i32 to index
      %c0_118 = arith.constant 0 : index
      %c0_119 = arith.constant 0 : index
      %209 = vector.load %arg7[%c0_117, %208, %c0_118, %c0_119] : memref<4x16x16x128xf32, #tpu.memory_space<vmem>>, vector<1x1x16x128xf32>
      %210 = vector.shape_cast %209 : vector<1x1x16x128xf32> to vector<16x128xf32>
      %211 = vector.broadcast %34 : f32 to vector<16x128xf32>
      %212 = arith.mulf %210, %211 : vector<16x128xf32>
      %213 = arith.addf %202, %212 : vector<16x128xf32>
      %214 = vector.broadcast %43 : f32 to vector<16x128xf32>
      %215 = arith.mulf %210, %214 : vector<16x128xf32>
      %216 = arith.addf %204, %215 : vector<16x128xf32>
      %217 = vector.broadcast %52 : f32 to vector<16x128xf32>
      %218 = arith.mulf %210, %217 : vector<16x128xf32>
      %219 = arith.addf %206, %218 : vector<16x128xf32>
      %c0_i32_120 = arith.constant 0 : i32
      %220 = arith.addi %arg9, %c0_i32_120 : i32
      %c1_121 = arith.constant 1 : index
      %221 = arith.index_cast %220 : i32 to index
      %c0_122 = arith.constant 0 : index
      %c0_123 = arith.constant 0 : index
      %222 = vector.load %arg7[%c1_121, %221, %c0_122, %c0_123] : memref<4x16x16x128xf32, #tpu.memory_space<vmem>>, vector<1x1x16x128xf32>
      %223 = vector.shape_cast %222 : vector<1x1x16x128xf32> to vector<16x128xf32>
      %224 = vector.broadcast %35 : f32 to vector<16x128xf32>
      %225 = arith.mulf %223, %224 : vector<16x128xf32>
      %226 = arith.addf %213, %225 : vector<16x128xf32>
      %227 = vector.broadcast %44 : f32 to vector<16x128xf32>
      %228 = arith.mulf %223, %227 : vector<16x128xf32>
      %229 = arith.addf %216, %228 : vector<16x128xf32>
      %230 = vector.broadcast %53 : f32 to vector<16x128xf32>
      %231 = arith.mulf %223, %230 : vector<16x128xf32>
      %232 = arith.addf %219, %231 : vector<16x128xf32>
      %c0_i32_124 = arith.constant 0 : i32
      %233 = arith.addi %arg9, %c0_i32_124 : i32
      %c0_125 = arith.constant 0 : index
      %c3_126 = arith.constant 3 : index
      %234 = arith.index_cast %233 : i32 to index
      %c0_127 = arith.constant 0 : index
      %c0_128 = arith.constant 0 : index
      %235 = vector.load %arg1[%c0_125, %c3_126, %234, %c0_127, %c0_128] : memref<1x4x16x16x128xf32, #tpu.memory_space<vmem>>, vector<1x1x1x16x128xf32>
      %236 = vector.shape_cast %235 : vector<1x1x1x16x128xf32> to vector<16x128xf32>
      %237 = vector.broadcast %36 : f32 to vector<16x128xf32>
      %238 = arith.mulf %236, %237 : vector<16x128xf32>
      %239 = arith.addf %226, %238 : vector<16x128xf32>
      %240 = vector.broadcast %45 : f32 to vector<16x128xf32>
      %241 = arith.mulf %236, %240 : vector<16x128xf32>
      %242 = arith.addf %229, %241 : vector<16x128xf32>
      %243 = vector.broadcast %54 : f32 to vector<16x128xf32>
      %244 = arith.mulf %236, %243 : vector<16x128xf32>
      %245 = arith.addf %232, %244 : vector<16x128xf32>
      %c0_i32_129 = arith.constant 0 : i32
      %246 = arith.addi %arg9, %c0_i32_129 : i32
      %c2_130 = arith.constant 2 : index
      %247 = arith.index_cast %246 : i32 to index
      %c0_131 = arith.constant 0 : index
      %c0_132 = arith.constant 0 : index
      %248 = vector.load %arg7[%c2_130, %247, %c0_131, %c0_132] : memref<4x16x16x128xf32, #tpu.memory_space<vmem>>, vector<1x1x16x128xf32>
      %249 = vector.shape_cast %248 : vector<1x1x16x128xf32> to vector<16x128xf32>
      %250 = vector.broadcast %37 : f32 to vector<16x128xf32>
      %251 = arith.mulf %249, %250 : vector<16x128xf32>
      %252 = arith.addf %239, %251 : vector<16x128xf32>
      %253 = vector.broadcast %46 : f32 to vector<16x128xf32>
      %254 = arith.mulf %249, %253 : vector<16x128xf32>
      %255 = arith.addf %242, %254 : vector<16x128xf32>
      %256 = vector.broadcast %55 : f32 to vector<16x128xf32>
      %257 = arith.mulf %249, %256 : vector<16x128xf32>
      %258 = arith.addf %245, %257 : vector<16x128xf32>
      %c0_i32_133 = arith.constant 0 : i32
      %259 = arith.addi %arg9, %c0_i32_133 : i32
      %c3_134 = arith.constant 3 : index
      %260 = arith.index_cast %259 : i32 to index
      %c0_135 = arith.constant 0 : index
      %c0_136 = arith.constant 0 : index
      %261 = vector.load %arg7[%c3_134, %260, %c0_135, %c0_136] : memref<4x16x16x128xf32, #tpu.memory_space<vmem>>, vector<1x1x16x128xf32>
      %262 = vector.shape_cast %261 : vector<1x1x16x128xf32> to vector<16x128xf32>
      %263 = vector.broadcast %38 : f32 to vector<16x128xf32>
      %264 = arith.mulf %262, %263 : vector<16x128xf32>
      %265 = arith.addf %252, %264 : vector<16x128xf32>
      %266 = vector.broadcast %47 : f32 to vector<16x128xf32>
      %267 = arith.mulf %262, %266 : vector<16x128xf32>
      %268 = arith.addf %255, %267 : vector<16x128xf32>
      %269 = vector.broadcast %56 : f32 to vector<16x128xf32>
      %270 = arith.mulf %262, %269 : vector<16x128xf32>
      %271 = arith.addf %258, %270 : vector<16x128xf32>
      %c1_i32_137 = arith.constant 1 : i32
      %272 = arith.addi %arg9, %c1_i32_137 : i32
      %c0_138 = arith.constant 0 : index
      %c1_139 = arith.constant 1 : index
      %273 = arith.index_cast %272 : i32 to index
      %c0_140 = arith.constant 0 : index
      %c0_141 = arith.constant 0 : index
      %274 = vector.load %arg1[%c0_138, %c1_139, %273, %c0_140, %c0_141] : memref<1x4x16x16x128xf32, #tpu.memory_space<vmem>>, vector<1x1x1x16x128xf32>
      %275 = vector.shape_cast %274 : vector<1x1x1x16x128xf32> to vector<16x128xf32>
      %276 = vector.broadcast %39 : f32 to vector<16x128xf32>
      %277 = arith.mulf %275, %276 : vector<16x128xf32>
      %278 = arith.addf %265, %277 : vector<16x128xf32>
      %279 = vector.broadcast %48 : f32 to vector<16x128xf32>
      %280 = arith.mulf %275, %279 : vector<16x128xf32>
      %281 = arith.addf %268, %280 : vector<16x128xf32>
      %282 = vector.broadcast %57 : f32 to vector<16x128xf32>
      %283 = arith.mulf %275, %282 : vector<16x128xf32>
      %284 = arith.addf %271, %283 : vector<16x128xf32>
      %c1_i32_142 = arith.constant 1 : i32
      %285 = arith.addi %arg9, %c1_i32_142 : i32
      %c0_143 = arith.constant 0 : index
      %286 = arith.index_cast %285 : i32 to index
      %c0_144 = arith.constant 0 : index
      %c0_145 = arith.constant 0 : index
      %287 = vector.load %arg7[%c0_143, %286, %c0_144, %c0_145] : memref<4x16x16x128xf32, #tpu.memory_space<vmem>>, vector<1x1x16x128xf32>
      %288 = vector.shape_cast %287 : vector<1x1x16x128xf32> to vector<16x128xf32>
      %289 = vector.broadcast %40 : f32 to vector<16x128xf32>
      %290 = arith.mulf %288, %289 : vector<16x128xf32>
      %291 = arith.addf %278, %290 : vector<16x128xf32>
      %292 = vector.broadcast %49 : f32 to vector<16x128xf32>
      %293 = arith.mulf %288, %292 : vector<16x128xf32>
      %294 = arith.addf %281, %293 : vector<16x128xf32>
      %295 = vector.broadcast %58 : f32 to vector<16x128xf32>
      %296 = arith.mulf %288, %295 : vector<16x128xf32>
      %297 = arith.addf %284, %296 : vector<16x128xf32>
      %c1_i32_146 = arith.constant 1 : i32
      %298 = arith.addi %arg9, %c1_i32_146 : i32
      %c1_147 = arith.constant 1 : index
      %299 = arith.index_cast %298 : i32 to index
      %c0_148 = arith.constant 0 : index
      %c0_149 = arith.constant 0 : index
      %300 = vector.load %arg7[%c1_147, %299, %c0_148, %c0_149] : memref<4x16x16x128xf32, #tpu.memory_space<vmem>>, vector<1x1x16x128xf32>
      %301 = vector.shape_cast %300 : vector<1x1x16x128xf32> to vector<16x128xf32>
      %302 = vector.broadcast %41 : f32 to vector<16x128xf32>
      %303 = arith.mulf %301, %302 : vector<16x128xf32>
      %304 = arith.addf %291, %303 : vector<16x128xf32>
      %305 = vector.broadcast %50 : f32 to vector<16x128xf32>
      %306 = arith.mulf %301, %305 : vector<16x128xf32>
      %307 = arith.addf %294, %306 : vector<16x128xf32>
      %308 = vector.broadcast %59 : f32 to vector<16x128xf32>
      %309 = arith.mulf %301, %308 : vector<16x128xf32>
      %310 = arith.addf %297, %309 : vector<16x128xf32>
      %311 = vector.broadcast %60 : f32 to vector<16x128xf32>
      %312 = arith.addf %304, %311 : vector<16x128xf32>
      %cst_150 = arith.constant 0.000000e+00 : f32
      %313 = vector.broadcast %cst_150 : f32 to vector<16x128xf32>
      %314 = arith.maximumf %312, %313 : vector<16x128xf32>
      %315 = arith.maximumf %188, %314 : vector<16x128xf32>
      %316 = vector.broadcast %61 : f32 to vector<16x128xf32>
      %317 = arith.addf %307, %316 : vector<16x128xf32>
      %cst_151 = arith.constant 0.000000e+00 : f32
      %318 = vector.broadcast %cst_151 : f32 to vector<16x128xf32>
      %319 = arith.maximumf %317, %318 : vector<16x128xf32>
      %320 = arith.maximumf %192, %319 : vector<16x128xf32>
      %321 = vector.broadcast %62 : f32 to vector<16x128xf32>
      %322 = arith.addf %310, %321 : vector<16x128xf32>
      %cst_152 = arith.constant 0.000000e+00 : f32
      %323 = vector.broadcast %cst_152 : f32 to vector<16x128xf32>
      %324 = arith.maximumf %322, %323 : vector<16x128xf32>
      %325 = arith.maximumf %196, %324 : vector<16x128xf32>
      %c0_i32_153 = arith.constant 0 : i32
      %326 = arith.addi %arg9, %c0_i32_153 : i32
      %c0_154 = arith.constant 0 : index
      %c2_155 = arith.constant 2 : index
      %327 = arith.index_cast %326 : i32 to index
      %c0_156 = arith.constant 0 : index
      %c0_157 = arith.constant 0 : index
      %328 = vector.load %arg1[%c0_154, %c2_155, %327, %c0_156, %c0_157] : memref<1x4x16x16x128xf32, #tpu.memory_space<vmem>>, vector<1x1x1x16x128xf32>
      %329 = vector.shape_cast %328 : vector<1x1x1x16x128xf32> to vector<16x128xf32>
      %330 = vector.broadcast %33 : f32 to vector<16x128xf32>
      %331 = arith.mulf %329, %330 : vector<16x128xf32>
      %332 = vector.broadcast %42 : f32 to vector<16x128xf32>
      %333 = arith.mulf %329, %332 : vector<16x128xf32>
      %334 = vector.broadcast %51 : f32 to vector<16x128xf32>
      %335 = arith.mulf %329, %334 : vector<16x128xf32>
      %c0_i32_158 = arith.constant 0 : i32
      %336 = arith.addi %arg9, %c0_i32_158 : i32
      %c0_159 = arith.constant 0 : index
      %c3_160 = arith.constant 3 : index
      %337 = arith.index_cast %336 : i32 to index
      %c0_161 = arith.constant 0 : index
      %c0_162 = arith.constant 0 : index
      %338 = vector.load %arg1[%c0_159, %c3_160, %337, %c0_161, %c0_162] : memref<1x4x16x16x128xf32, #tpu.memory_space<vmem>>, vector<1x1x1x16x128xf32>
      %339 = vector.shape_cast %338 : vector<1x1x1x16x128xf32> to vector<16x128xf32>
      %340 = vector.broadcast %34 : f32 to vector<16x128xf32>
      %341 = arith.mulf %339, %340 : vector<16x128xf32>
      %342 = arith.addf %331, %341 : vector<16x128xf32>
      %343 = vector.broadcast %43 : f32 to vector<16x128xf32>
      %344 = arith.mulf %339, %343 : vector<16x128xf32>
      %345 = arith.addf %333, %344 : vector<16x128xf32>
      %346 = vector.broadcast %52 : f32 to vector<16x128xf32>
      %347 = arith.mulf %339, %346 : vector<16x128xf32>
      %348 = arith.addf %335, %347 : vector<16x128xf32>
      %c0_i32_163 = arith.constant 0 : i32
      %349 = arith.addi %arg9, %c0_i32_163 : i32
      %c2_164 = arith.constant 2 : index
      %350 = arith.index_cast %349 : i32 to index
      %c0_165 = arith.constant 0 : index
      %c0_166 = arith.constant 0 : index
      %351 = vector.load %arg7[%c2_164, %350, %c0_165, %c0_166] : memref<4x16x16x128xf32, #tpu.memory_space<vmem>>, vector<1x1x16x128xf32>
      %352 = vector.shape_cast %351 : vector<1x1x16x128xf32> to vector<16x128xf32>
      %353 = vector.broadcast %35 : f32 to vector<16x128xf32>
      %354 = arith.mulf %352, %353 : vector<16x128xf32>
      %355 = arith.addf %342, %354 : vector<16x128xf32>
      %356 = vector.broadcast %44 : f32 to vector<16x128xf32>
      %357 = arith.mulf %352, %356 : vector<16x128xf32>
      %358 = arith.addf %345, %357 : vector<16x128xf32>
      %359 = vector.broadcast %53 : f32 to vector<16x128xf32>
      %360 = arith.mulf %352, %359 : vector<16x128xf32>
      %361 = arith.addf %348, %360 : vector<16x128xf32>
      %c1_i32_167 = arith.constant 1 : i32
      %362 = arith.addi %arg9, %c1_i32_167 : i32
      %c0_168 = arith.constant 0 : index
      %c0_169 = arith.constant 0 : index
      %363 = arith.index_cast %362 : i32 to index
      %c0_170 = arith.constant 0 : index
      %c0_171 = arith.constant 0 : index
      %364 = vector.load %arg1[%c0_168, %c0_169, %363, %c0_170, %c0_171] : memref<1x4x16x16x128xf32, #tpu.memory_space<vmem>>, vector<1x1x1x16x128xf32>
      %365 = vector.shape_cast %364 : vector<1x1x1x16x128xf32> to vector<16x128xf32>
      %366 = vector.broadcast %36 : f32 to vector<16x128xf32>
      %367 = arith.mulf %365, %366 : vector<16x128xf32>
      %368 = arith.addf %355, %367 : vector<16x128xf32>
      %369 = vector.broadcast %45 : f32 to vector<16x128xf32>
      %370 = arith.mulf %365, %369 : vector<16x128xf32>
      %371 = arith.addf %358, %370 : vector<16x128xf32>
      %372 = vector.broadcast %54 : f32 to vector<16x128xf32>
      %373 = arith.mulf %365, %372 : vector<16x128xf32>
      %374 = arith.addf %361, %373 : vector<16x128xf32>
      %c1_i32_172 = arith.constant 1 : i32
      %375 = arith.addi %arg9, %c1_i32_172 : i32
      %c0_173 = arith.constant 0 : index
      %c1_174 = arith.constant 1 : index
      %376 = arith.index_cast %375 : i32 to index
      %c0_175 = arith.constant 0 : index
      %c0_176 = arith.constant 0 : index
      %377 = vector.load %arg1[%c0_173, %c1_174, %376, %c0_175, %c0_176] : memref<1x4x16x16x128xf32, #tpu.memory_space<vmem>>, vector<1x1x1x16x128xf32>
      %378 = vector.shape_cast %377 : vector<1x1x1x16x128xf32> to vector<16x128xf32>
      %379 = vector.broadcast %37 : f32 to vector<16x128xf32>
      %380 = arith.mulf %378, %379 : vector<16x128xf32>
      %381 = arith.addf %368, %380 : vector<16x128xf32>
      %382 = vector.broadcast %46 : f32 to vector<16x128xf32>
      %383 = arith.mulf %378, %382 : vector<16x128xf32>
      %384 = arith.addf %371, %383 : vector<16x128xf32>
      %385 = vector.broadcast %55 : f32 to vector<16x128xf32>
      %386 = arith.mulf %378, %385 : vector<16x128xf32>
      %387 = arith.addf %374, %386 : vector<16x128xf32>
      %c1_i32_177 = arith.constant 1 : i32
      %388 = arith.addi %arg9, %c1_i32_177 : i32
      %c0_178 = arith.constant 0 : index
      %389 = arith.index_cast %388 : i32 to index
      %c0_179 = arith.constant 0 : index
      %c0_180 = arith.constant 0 : index
      %390 = vector.load %arg7[%c0_178, %389, %c0_179, %c0_180] : memref<4x16x16x128xf32, #tpu.memory_space<vmem>>, vector<1x1x16x128xf32>
      %391 = vector.shape_cast %390 : vector<1x1x16x128xf32> to vector<16x128xf32>
      %392 = vector.broadcast %38 : f32 to vector<16x128xf32>
      %393 = arith.mulf %391, %392 : vector<16x128xf32>
      %394 = arith.addf %381, %393 : vector<16x128xf32>
      %395 = vector.broadcast %47 : f32 to vector<16x128xf32>
      %396 = arith.mulf %391, %395 : vector<16x128xf32>
      %397 = arith.addf %384, %396 : vector<16x128xf32>
      %398 = vector.broadcast %56 : f32 to vector<16x128xf32>
      %399 = arith.mulf %391, %398 : vector<16x128xf32>
      %400 = arith.addf %387, %399 : vector<16x128xf32>
      %c1_i32_181 = arith.constant 1 : i32
      %401 = arith.addi %arg9, %c1_i32_181 : i32
      %c0_182 = arith.constant 0 : index
      %c2_183 = arith.constant 2 : index
      %402 = arith.index_cast %401 : i32 to index
      %c0_184 = arith.constant 0 : index
      %c0_185 = arith.constant 0 : index
      %403 = vector.load %arg1[%c0_182, %c2_183, %402, %c0_184, %c0_185] : memref<1x4x16x16x128xf32, #tpu.memory_space<vmem>>, vector<1x1x1x16x128xf32>
      %404 = vector.shape_cast %403 : vector<1x1x1x16x128xf32> to vector<16x128xf32>
      %405 = vector.broadcast %39 : f32 to vector<16x128xf32>
      %406 = arith.mulf %404, %405 : vector<16x128xf32>
      %407 = arith.addf %394, %406 : vector<16x128xf32>
      %408 = vector.broadcast %48 : f32 to vector<16x128xf32>
      %409 = arith.mulf %404, %408 : vector<16x128xf32>
      %410 = arith.addf %397, %409 : vector<16x128xf32>
      %411 = vector.broadcast %57 : f32 to vector<16x128xf32>
      %412 = arith.mulf %404, %411 : vector<16x128xf32>
      %413 = arith.addf %400, %412 : vector<16x128xf32>
      %c1_i32_186 = arith.constant 1 : i32
      %414 = arith.addi %arg9, %c1_i32_186 : i32
      %c0_187 = arith.constant 0 : index
      %c3_188 = arith.constant 3 : index
      %415 = arith.index_cast %414 : i32 to index
      %c0_189 = arith.constant 0 : index
      %c0_190 = arith.constant 0 : index
      %416 = vector.load %arg1[%c0_187, %c3_188, %415, %c0_189, %c0_190] : memref<1x4x16x16x128xf32, #tpu.memory_space<vmem>>, vector<1x1x1x16x128xf32>
      %417 = vector.shape_cast %416 : vector<1x1x1x16x128xf32> to vector<16x128xf32>
      %418 = vector.broadcast %40 : f32 to vector<16x128xf32>
      %419 = arith.mulf %417, %418 : vector<16x128xf32>
      %420 = arith.addf %407, %419 : vector<16x128xf32>
      %421 = vector.broadcast %49 : f32 to vector<16x128xf32>
      %422 = arith.mulf %417, %421 : vector<16x128xf32>
      %423 = arith.addf %410, %422 : vector<16x128xf32>
      %424 = vector.broadcast %58 : f32 to vector<16x128xf32>
      %425 = arith.mulf %417, %424 : vector<16x128xf32>
      %426 = arith.addf %413, %425 : vector<16x128xf32>
      %c1_i32_191 = arith.constant 1 : i32
      %427 = arith.addi %arg9, %c1_i32_191 : i32
      %c2_192 = arith.constant 2 : index
      %428 = arith.index_cast %427 : i32 to index
      %c0_193 = arith.constant 0 : index
      %c0_194 = arith.constant 0 : index
      %429 = vector.load %arg7[%c2_192, %428, %c0_193, %c0_194] : memref<4x16x16x128xf32, #tpu.memory_space<vmem>>, vector<1x1x16x128xf32>
      %430 = vector.shape_cast %429 : vector<1x1x16x128xf32> to vector<16x128xf32>
      %431 = vector.broadcast %41 : f32 to vector<16x128xf32>
      %432 = arith.mulf %430, %431 : vector<16x128xf32>
      %433 = arith.addf %420, %432 : vector<16x128xf32>
      %434 = vector.broadcast %50 : f32 to vector<16x128xf32>
      %435 = arith.mulf %430, %434 : vector<16x128xf32>
      %436 = arith.addf %423, %435 : vector<16x128xf32>
      %437 = vector.broadcast %59 : f32 to vector<16x128xf32>
      %438 = arith.mulf %430, %437 : vector<16x128xf32>
      %439 = arith.addf %426, %438 : vector<16x128xf32>
      %440 = vector.broadcast %60 : f32 to vector<16x128xf32>
      %441 = arith.addf %433, %440 : vector<16x128xf32>
      %cst_195 = arith.constant 0.000000e+00 : f32
      %442 = vector.broadcast %cst_195 : f32 to vector<16x128xf32>
      %443 = arith.maximumf %441, %442 : vector<16x128xf32>
      %444 = arith.maximumf %315, %443 : vector<16x128xf32>
      %445 = vector.broadcast %61 : f32 to vector<16x128xf32>
      %446 = arith.addf %436, %445 : vector<16x128xf32>
      %cst_196 = arith.constant 0.000000e+00 : f32
      %447 = vector.broadcast %cst_196 : f32 to vector<16x128xf32>
      %448 = arith.maximumf %446, %447 : vector<16x128xf32>
      %449 = arith.maximumf %320, %448 : vector<16x128xf32>
      %450 = vector.broadcast %62 : f32 to vector<16x128xf32>
      %451 = arith.addf %439, %450 : vector<16x128xf32>
      %cst_197 = arith.constant 0.000000e+00 : f32
      %452 = vector.broadcast %cst_197 : f32 to vector<16x128xf32>
      %453 = arith.maximumf %451, %452 : vector<16x128xf32>
      %454 = arith.maximumf %325, %453 : vector<16x128xf32>
      %c0_i32_198 = arith.constant 0 : i32
      %455 = arith.addi %arg9, %c0_i32_198 : i32
      %c0_199 = arith.constant 0 : index
      %c3_200 = arith.constant 3 : index
      %456 = arith.index_cast %455 : i32 to index
      %c0_201 = arith.constant 0 : index
      %c0_202 = arith.constant 0 : index
      %457 = vector.load %arg1[%c0_199, %c3_200, %456, %c0_201, %c0_202] : memref<1x4x16x16x128xf32, #tpu.memory_space<vmem>>, vector<1x1x1x16x128xf32>
      %458 = vector.shape_cast %457 : vector<1x1x1x16x128xf32> to vector<16x128xf32>
      %459 = vector.broadcast %33 : f32 to vector<16x128xf32>
      %460 = arith.mulf %458, %459 : vector<16x128xf32>
      %461 = vector.broadcast %42 : f32 to vector<16x128xf32>
      %462 = arith.mulf %458, %461 : vector<16x128xf32>
      %463 = vector.broadcast %51 : f32 to vector<16x128xf32>
      %464 = arith.mulf %458, %463 : vector<16x128xf32>
      %c0_i32_203 = arith.constant 0 : i32
      %465 = arith.addi %arg9, %c0_i32_203 : i32
      %c2_204 = arith.constant 2 : index
      %466 = arith.index_cast %465 : i32 to index
      %c0_205 = arith.constant 0 : index
      %c0_206 = arith.constant 0 : index
      %467 = vector.load %arg7[%c2_204, %466, %c0_205, %c0_206] : memref<4x16x16x128xf32, #tpu.memory_space<vmem>>, vector<1x1x16x128xf32>
      %468 = vector.shape_cast %467 : vector<1x1x16x128xf32> to vector<16x128xf32>
      %469 = vector.broadcast %34 : f32 to vector<16x128xf32>
      %470 = arith.mulf %468, %469 : vector<16x128xf32>
      %471 = arith.addf %460, %470 : vector<16x128xf32>
      %472 = vector.broadcast %43 : f32 to vector<16x128xf32>
      %473 = arith.mulf %468, %472 : vector<16x128xf32>
      %474 = arith.addf %462, %473 : vector<16x128xf32>
      %475 = vector.broadcast %52 : f32 to vector<16x128xf32>
      %476 = arith.mulf %468, %475 : vector<16x128xf32>
      %477 = arith.addf %464, %476 : vector<16x128xf32>
      %c0_i32_207 = arith.constant 0 : i32
      %478 = arith.addi %arg9, %c0_i32_207 : i32
      %c3_208 = arith.constant 3 : index
      %479 = arith.index_cast %478 : i32 to index
      %c0_209 = arith.constant 0 : index
      %c0_210 = arith.constant 0 : index
      %480 = vector.load %arg7[%c3_208, %479, %c0_209, %c0_210] : memref<4x16x16x128xf32, #tpu.memory_space<vmem>>, vector<1x1x16x128xf32>
      %481 = vector.shape_cast %480 : vector<1x1x16x128xf32> to vector<16x128xf32>
      %482 = vector.broadcast %35 : f32 to vector<16x128xf32>
      %483 = arith.mulf %481, %482 : vector<16x128xf32>
      %484 = arith.addf %471, %483 : vector<16x128xf32>
      %485 = vector.broadcast %44 : f32 to vector<16x128xf32>
      %486 = arith.mulf %481, %485 : vector<16x128xf32>
      %487 = arith.addf %474, %486 : vector<16x128xf32>
      %488 = vector.broadcast %53 : f32 to vector<16x128xf32>
      %489 = arith.mulf %481, %488 : vector<16x128xf32>
      %490 = arith.addf %477, %489 : vector<16x128xf32>
      %c1_i32_211 = arith.constant 1 : i32
      %491 = arith.addi %arg9, %c1_i32_211 : i32
      %c0_212 = arith.constant 0 : index
      %c1_213 = arith.constant 1 : index
      %492 = arith.index_cast %491 : i32 to index
      %c0_214 = arith.constant 0 : index
      %c0_215 = arith.constant 0 : index
      %493 = vector.load %arg1[%c0_212, %c1_213, %492, %c0_214, %c0_215] : memref<1x4x16x16x128xf32, #tpu.memory_space<vmem>>, vector<1x1x1x16x128xf32>
      %494 = vector.shape_cast %493 : vector<1x1x1x16x128xf32> to vector<16x128xf32>
      %495 = vector.broadcast %36 : f32 to vector<16x128xf32>
      %496 = arith.mulf %494, %495 : vector<16x128xf32>
      %497 = arith.addf %484, %496 : vector<16x128xf32>
      %498 = vector.broadcast %45 : f32 to vector<16x128xf32>
      %499 = arith.mulf %494, %498 : vector<16x128xf32>
      %500 = arith.addf %487, %499 : vector<16x128xf32>
      %501 = vector.broadcast %54 : f32 to vector<16x128xf32>
      %502 = arith.mulf %494, %501 : vector<16x128xf32>
      %503 = arith.addf %490, %502 : vector<16x128xf32>
      %c1_i32_216 = arith.constant 1 : i32
      %504 = arith.addi %arg9, %c1_i32_216 : i32
      %c0_217 = arith.constant 0 : index
      %505 = arith.index_cast %504 : i32 to index
      %c0_218 = arith.constant 0 : index
      %c0_219 = arith.constant 0 : index
      %506 = vector.load %arg7[%c0_217, %505, %c0_218, %c0_219] : memref<4x16x16x128xf32, #tpu.memory_space<vmem>>, vector<1x1x16x128xf32>
      %507 = vector.shape_cast %506 : vector<1x1x16x128xf32> to vector<16x128xf32>
      %508 = vector.broadcast %37 : f32 to vector<16x128xf32>
      %509 = arith.mulf %507, %508 : vector<16x128xf32>
      %510 = arith.addf %497, %509 : vector<16x128xf32>
      %511 = vector.broadcast %46 : f32 to vector<16x128xf32>
      %512 = arith.mulf %507, %511 : vector<16x128xf32>
      %513 = arith.addf %500, %512 : vector<16x128xf32>
      %514 = vector.broadcast %55 : f32 to vector<16x128xf32>
      %515 = arith.mulf %507, %514 : vector<16x128xf32>
      %516 = arith.addf %503, %515 : vector<16x128xf32>
      %c1_i32_220 = arith.constant 1 : i32
      %517 = arith.addi %arg9, %c1_i32_220 : i32
      %c1_221 = arith.constant 1 : index
      %518 = arith.index_cast %517 : i32 to index
      %c0_222 = arith.constant 0 : index
      %c0_223 = arith.constant 0 : index
      %519 = vector.load %arg7[%c1_221, %518, %c0_222, %c0_223] : memref<4x16x16x128xf32, #tpu.memory_space<vmem>>, vector<1x1x16x128xf32>
      %520 = vector.shape_cast %519 : vector<1x1x16x128xf32> to vector<16x128xf32>
      %521 = vector.broadcast %38 : f32 to vector<16x128xf32>
      %522 = arith.mulf %520, %521 : vector<16x128xf32>
      %523 = arith.addf %510, %522 : vector<16x128xf32>
      %524 = vector.broadcast %47 : f32 to vector<16x128xf32>
      %525 = arith.mulf %520, %524 : vector<16x128xf32>
      %526 = arith.addf %513, %525 : vector<16x128xf32>
      %527 = vector.broadcast %56 : f32 to vector<16x128xf32>
      %528 = arith.mulf %520, %527 : vector<16x128xf32>
      %529 = arith.addf %516, %528 : vector<16x128xf32>
      %c1_i32_224 = arith.constant 1 : i32
      %530 = arith.addi %arg9, %c1_i32_224 : i32
      %c0_225 = arith.constant 0 : index
      %c3_226 = arith.constant 3 : index
      %531 = arith.index_cast %530 : i32 to index
      %c0_227 = arith.constant 0 : index
      %c0_228 = arith.constant 0 : index
      %532 = vector.load %arg1[%c0_225, %c3_226, %531, %c0_227, %c0_228] : memref<1x4x16x16x128xf32, #tpu.memory_space<vmem>>, vector<1x1x1x16x128xf32>
      %533 = vector.shape_cast %532 : vector<1x1x1x16x128xf32> to vector<16x128xf32>
      %534 = vector.broadcast %39 : f32 to vector<16x128xf32>
      %535 = arith.mulf %533, %534 : vector<16x128xf32>
      %536 = arith.addf %523, %535 : vector<16x128xf32>
      %537 = vector.broadcast %48 : f32 to vector<16x128xf32>
      %538 = arith.mulf %533, %537 : vector<16x128xf32>
      %539 = arith.addf %526, %538 : vector<16x128xf32>
      %540 = vector.broadcast %57 : f32 to vector<16x128xf32>
      %541 = arith.mulf %533, %540 : vector<16x128xf32>
      %542 = arith.addf %529, %541 : vector<16x128xf32>
      %c1_i32_229 = arith.constant 1 : i32
      %543 = arith.addi %arg9, %c1_i32_229 : i32
      %c2_230 = arith.constant 2 : index
      %544 = arith.index_cast %543 : i32 to index
      %c0_231 = arith.constant 0 : index
      %c0_232 = arith.constant 0 : index
      %545 = vector.load %arg7[%c2_230, %544, %c0_231, %c0_232] : memref<4x16x16x128xf32, #tpu.memory_space<vmem>>, vector<1x1x16x128xf32>
      %546 = vector.shape_cast %545 : vector<1x1x16x128xf32> to vector<16x128xf32>
      %547 = vector.broadcast %40 : f32 to vector<16x128xf32>
      %548 = arith.mulf %546, %547 : vector<16x128xf32>
      %549 = arith.addf %536, %548 : vector<16x128xf32>
      %550 = vector.broadcast %49 : f32 to vector<16x128xf32>
      %551 = arith.mulf %546, %550 : vector<16x128xf32>
      %552 = arith.addf %539, %551 : vector<16x128xf32>
      %553 = vector.broadcast %58 : f32 to vector<16x128xf32>
      %554 = arith.mulf %546, %553 : vector<16x128xf32>
      %555 = arith.addf %542, %554 : vector<16x128xf32>
      %c1_i32_233 = arith.constant 1 : i32
      %556 = arith.addi %arg9, %c1_i32_233 : i32
      %c3_234 = arith.constant 3 : index
      %557 = arith.index_cast %556 : i32 to index
      %c0_235 = arith.constant 0 : index
      %c0_236 = arith.constant 0 : index
      %558 = vector.load %arg7[%c3_234, %557, %c0_235, %c0_236] : memref<4x16x16x128xf32, #tpu.memory_space<vmem>>, vector<1x1x16x128xf32>
      %559 = vector.shape_cast %558 : vector<1x1x16x128xf32> to vector<16x128xf32>
      %560 = vector.broadcast %41 : f32 to vector<16x128xf32>
      %561 = arith.mulf %559, %560 : vector<16x128xf32>
      %562 = arith.addf %549, %561 : vector<16x128xf32>
      %563 = vector.broadcast %50 : f32 to vector<16x128xf32>
      %564 = arith.mulf %559, %563 : vector<16x128xf32>
      %565 = arith.addf %552, %564 : vector<16x128xf32>
      %566 = vector.broadcast %59 : f32 to vector<16x128xf32>
      %567 = arith.mulf %559, %566 : vector<16x128xf32>
      %568 = arith.addf %555, %567 : vector<16x128xf32>
      %569 = vector.broadcast %60 : f32 to vector<16x128xf32>
      %570 = arith.addf %562, %569 : vector<16x128xf32>
      %cst_237 = arith.constant 0.000000e+00 : f32
      %571 = vector.broadcast %cst_237 : f32 to vector<16x128xf32>
      %572 = arith.maximumf %570, %571 : vector<16x128xf32>
      %573 = arith.maximumf %444, %572 : vector<16x128xf32>
      %574 = vector.broadcast %61 : f32 to vector<16x128xf32>
      %575 = arith.addf %565, %574 : vector<16x128xf32>
      %cst_238 = arith.constant 0.000000e+00 : f32
      %576 = vector.broadcast %cst_238 : f32 to vector<16x128xf32>
      %577 = arith.maximumf %575, %576 : vector<16x128xf32>
      %578 = arith.maximumf %449, %577 : vector<16x128xf32>
      %579 = vector.broadcast %62 : f32 to vector<16x128xf32>
      %580 = arith.addf %568, %579 : vector<16x128xf32>
      %cst_239 = arith.constant 0.000000e+00 : f32
      %581 = vector.broadcast %cst_239 : f32 to vector<16x128xf32>
      %582 = arith.maximumf %580, %581 : vector<16x128xf32>
      %583 = arith.maximumf %454, %582 : vector<16x128xf32>
      %c0_i32_240 = arith.constant 0 : i32
      %584 = arith.addi %c0_i32_240, %arg9 : i32
      %585 = arith.index_cast %584 : i32 to index
      %c0_241 = arith.constant 0 : index
      %c0_242 = arith.constant 0 : index
      %586 = vector.load %arg8[%585, %c0_241, %c0_242] : memref<45x16x128xf32, #tpu.memory_space<vmem>>, vector<1x16x128xf32>
      %587 = vector.shape_cast %586 : vector<1x16x128xf32> to vector<16x128xf32>
      %588 = vector.shape_cast %573 : vector<16x128xf32> to vector<1x16x128xf32>
      tpu.vector_store %arg8[%585, %c0_241, %c0_242], %588 {strides = array<i32>} : memref<45x16x128xf32, #tpu.memory_space<vmem>>, vector<1x16x128xf32>,
      %c15_i32_243 = arith.constant 15 : i32
      %589 = arith.addi %c15_i32_243, %arg9 : i32
      %590 = arith.index_cast %589 : i32 to index
      %c0_244 = arith.constant 0 : index
      %c0_245 = arith.constant 0 : index
      %591 = vector.load %arg8[%590, %c0_244, %c0_245] : memref<45x16x128xf32, #tpu.memory_space<vmem>>, vector<1x16x128xf32>
      %592 = vector.shape_cast %591 : vector<1x16x128xf32> to vector<16x128xf32>
      %593 = vector.shape_cast %578 : vector<16x128xf32> to vector<1x16x128xf32>
      tpu.vector_store %arg8[%590, %c0_244, %c0_245], %593 {strides = array<i32>} : memref<45x16x128xf32, #tpu.memory_space<vmem>>, vector<1x16x128xf32>,
      %c30_i32 = arith.constant 30 : i32
      %594 = arith.addi %c30_i32, %arg9 : i32
      %595 = arith.index_cast %594 : i32 to index
      %c0_246 = arith.constant 0 : index
      %c0_247 = arith.constant 0 : index
      %596 = vector.load %arg8[%595, %c0_246, %c0_247] : memref<45x16x128xf32, #tpu.memory_space<vmem>>, vector<1x16x128xf32>
      %597 = vector.shape_cast %596 : vector<1x16x128xf32> to vector<16x128xf32>
      %598 = vector.shape_cast %583 : vector<16x128xf32> to vector<1x16x128xf32>
      tpu.vector_store %arg8[%595, %c0_246, %c0_247], %598 {strides = array<i32>} : memref<45x16x128xf32, #tpu.memory_space<vmem>>, vector<1x16x128xf32>,
    }
    %c15_i32_55 = arith.constant 15 : i32
    %c0_56 = arith.constant 0 : index
    %c0_57 = arith.constant 0 : index
    %c0_58 = arith.constant 0 : index
    %64 = vector.load %arg8[%c0_56, %c0_57, %c0_58] : memref<45x16x128xf32, #tpu.memory_space<vmem>>, vector<45x16x128xf32>
    %65 = vector.shape_cast %64 : vector<45x16x128xf32> to vector<720x128xf32>
    %c0_59 = arith.constant 0 : index
    %c0_60 = arith.constant 0 : index
    %66 = vector.load %arg4[%c0_59, %c0_60] : memref<10x720xf32, #tpu.memory_space<vmem>>, vector<10x720xf32>
    %cst_61 = arith.constant dense<0.000000e+00> : vector<10x128xf32>
    %67 = tpu.matmul %66, %65, %cst_61 {dimension_numbers = #tpu.dot_dimension_numbers<[1], [0], [0], [1], [0, 0, 1, 1], [], []>} : vector<10x720xf32>, vector<720x128xf32>, vector<10x128xf32> -> vector<10x128xf32>
    %c0_62 = arith.constant 0 : index
    %c0_63 = arith.constant 0 : index
    %68 = vector.load %arg5[%c0_62, %c0_63] : memref<10x128xf32, #tpu.memory_space<vmem>>, vector<10x128xf32>
    %69 = arith.addf %67, %68 : vector<10x128xf32>
    %c0_64 = arith.constant 0 : index
    %c0_65 = arith.constant 0 : index
    %70 = vector.load %arg6[%c0_64, %c0_65] : memref<10x128xf32, #tpu.memory_space<vmem>>, vector<10x128xf32>
    tpu.vector_store %arg6[%c0_64, %c0_65], %69 {strides = array<i32>} : memref<10x128xf32, #tpu.memory_space<vmem>>, vector<10x128xf32>,
    return
  }
  func.func @transform_0(%arg0: i32) -> (i32, i32, i32, i32, i32) {
    %c0_i32 = arith.constant 0 : i32
    %c0_i32_0 = arith.constant 0 : i32
    %c0_i32_1 = arith.constant 0 : i32
    %c0_i32_2 = arith.constant 0 : i32
    %c0_i32_3 = arith.constant 0 : i32
    return %arg0, %c0_i32, %c0_i32_0, %c0_i32_1, %c0_i32_2 : i32, i32, i32, i32, i32
  }
  func.func @transform_1(%arg0: i32) -> i32 {
    %c0_i32 = arith.constant 0 : i32
    %c0_i32_0 = arith.constant 0 : i32
    return %c0_i32 : i32
  }
  func.func @transform_2(%arg0: i32) -> i32 {
    %c0_i32 = arith.constant 0 : i32
    %c0_i32_0 = arith.constant 0 : i32
    return %c0_i32 : i32
  }
  func.func @transform_3(%arg0: i32) -> (i32, i32) {
    %c0_i32 = arith.constant 0 : i32
    %c0_i32_0 = arith.constant 0 : i32
    %c0_i32_1 = arith.constant 0 : i32
    return %c0_i32, %c0_i32_0 : i32, i32
  }
  func.func @transform_4(%arg0: i32) -> (i32, i32) {
    %c0_i32 = arith.constant 0 : i32
    %c0_i32_0 = arith.constant 0 : i32
    %c0_i32_1 = arith.constant 0 : i32
    return %c0_i32, %c0_i32_0 : i32, i32
  }
  func.func @transform_5(%arg0: i32) -> (i32, i32) {
    %c0_i32 = arith.constant 0 : i32
    %c0_i32_0 = arith.constant 0 : i32
    return %c0_i32, %arg0 : i32, i32
  }
}

</mosaic_0001>

<llo_original>
// kernel: tpu_custom_call.1
$region0: #{tpu_custom_call.1}
  #allocation0 [shape = 'u32[]', space=smem, size = 0x4, offset = 0x4, fixed_abs, tag = 'smem constant byte address 0x4 - core index']
  #allocation1 [shape = 'u32[144,128]{1,0:T(1,128)}', space=vmem, size = 0x12000, scoped, tag = 'internal scratch']
  #allocation2 [shape = 'f32[4,16,16,128]{3,2,1,0:T(8,128)}', space=vmem, size = 0x80000, scoped, tag = 'scratch operand']
  #allocation3 [shape = 'f32[45,16,128]{2,1,0:T(8,128)}', space=vmem, size = 0x5a000, scoped, tag = 'scratch operand']
  %s0 = inlined_call_operand.hbm [shape: f32[1,4,16,16,128], index: 0, kind: input, shape index: {}]
  %s1 = inlined_call_operand.vmem [shape: f32[27], index: 1, kind: input, shape index: {}]
  %s2 = inlined_call_operand.vmem [shape: f32[3], index: 2, kind: input, shape index: {}]
  %s3 = inlined_call_operand.hbm [shape: f32[10,720], index: 3, kind: input, shape index: {}]
  %s4 = inlined_call_operand.hbm [shape: f32[10,128], index: 4, kind: input, shape index: {}]
  %s5 = inlined_call_operand.hbm [shape: f32[10,128], index: 5, kind: output, shape index: {}]
  %s6 = sld [smem:[#allocation0]]
  $region57: #{tpu_custom_call.1} parent=0
    _
  %s8 = ssub.s32 1, %s6
  %s9 = scalar_select 0, %s8, %s6
  $region1: #{tpu_custom_call.1} parent=0
    #allocation4 [shape = 'u8[524288]{0}', space=vmem, size = 0x80000, scoped, tag = 'input window, operand 0, single buffered']
    #allocation5 [shape = 's32[1]{0}', space=sflag, size = 0x4, scoped, tag = 'scoped memory for tpu_custom_call.1']
    #allocation6 [shape = 's32[1]{0}', space=sflag, size = 0x4, scoped, tag = 'scoped memory for tpu_custom_call.1']
    #allocation7 [shape = 's32[1]{0}', space=sflag, size = 0x4, scoped, tag = 'scoped memory for tpu_custom_call.1']
    #allocation8 [shape = 'u8[512]{0}', space=smem, size = 0x200, scoped, tag = 'input window, operand 1, single buffered']
    #allocation9 [shape = 'u8[512]{0}', space=smem, size = 0x200, scoped, tag = 'input window, operand 2, single buffered']
    #allocation10 [shape = 's32[1]{0}', space=sflag, size = 0x4, scoped, tag = 'scoped memory for tpu_custom_call.1']
    #allocation11 [shape = 'u8[49152]{0}', space=vmem, size = 0xc000, scoped, tag = 'input window, operand 3, single buffered']
    #allocation12 [shape = 's32[1]{0}', space=sflag, size = 0x4, scoped, tag = 'scoped memory for tpu_custom_call.1']
    #allocation13 [shape = 'u8[8192]{0}', space=vmem, size = 0x2000, scoped, tag = 'input window, operand 4, single buffered']
    #allocation14 [shape = 'u8[8192]{0}', space=vmem, size = 0x2000, scoped, tag = 'output window, operand 0, single buffered']
    %10 = vsyncpa [#allocation5], 0
    %11 = vsyncpa [#allocation7], 0
    %12 = vsyncpa [#allocation10], 0
    %13 = vsyncpa [#allocation12], 0
    %14 = vsyncpa [#allocation6], 0
    // Predicated region
    $region2: #{tpu_custom_call.1} parent=1 // pred_check
      _
    $region3: #{tpu_custom_call.1} parent=1 // pred_check_branch
      %16 = sbr.rel (0) target = $region5
    $region4: #{tpu_custom_call.1} parent=1 // pred_region
      %s18 = ssub.s32 16384, 16384
      %19 = vsyncadd [#allocation5], %s18
      %s20 = sshll.u32 [#allocation4], 4
      %s21 = int_to_ptr.vmem [resolvable:$true] %s20
      %26 = dma.hbm_to_vmem [thread:$0]  %s0, 16384, %s21, [#allocation5], 128, 128, 8
    $region5: #{tpu_custom_call.1} parent=1 // pred_fallthru
      _
    // Predicated region
    $region6: #{tpu_custom_call.1} parent=1 // pred_check
      _
    $region7: #{tpu_custom_call.1} parent=1 // pred_check_branch
      %28 = sbr.rel (0) target = $region9
    $region8: #{tpu_custom_call.1} parent=1 // pred_region
      %s30 = ssub.s32 16, 16
      %31 = vsyncadd [#allocation7], %s30
      %s33 = sshll.u32 %s1, 4
      %s34 = int_to_ptr.vmem [resolvable:$true] %s33
      %36 = dma.vmem_to_smem %s34, 16, [#allocation8], [#allocation7]
    $region9: #{tpu_custom_call.1} parent=1 // pred_fallthru
      _
    // Predicated region
    $region10: #{tpu_custom_call.1} parent=1 // pred_check
      _
    $region11: #{tpu_custom_call.1} parent=1 // pred_check_branch
      %38 = sbr.rel (0) target = $region13
    $region12: #{tpu_custom_call.1} parent=1 // pred_region
      %s40 = ssub.s32 16, 16
      %41 = vsyncadd [#allocation10], %s40
      %s43 = sshll.u32 %s2, 4
      %s44 = int_to_ptr.vmem [resolvable:$true] %s43
      %46 = dma.vmem_to_smem %s44, 16, [#allocation9], [#allocation10]
    $region13: #{tpu_custom_call.1} parent=1 // pred_fallthru
      _
    // Predicated region
    $region14: #{tpu_custom_call.1} parent=1 // pred_check
      _
    $region15: #{tpu_custom_call.1} parent=1 // pred_check_branch
      %48 = sbr.rel (0) target = $region17
    $region16: #{tpu_custom_call.1} parent=1 // pred_region
      %s50 = ssub.s32 1536, 1536
      %51 = vsyncadd [#allocation12], %s50
      %s52 = sshll.u32 [#allocation11], 4
      %s53 = int_to_ptr.vmem [resolvable:$true] %s52
      %58 = dma.hbm_to_vmem [thread:$0]  %s3, 1536, %s53, [#allocation12], 768, 768, 48
    $region17: #{tpu_custom_call.1} parent=1 // pred_fallthru
      _
    // Predicated region
    $region18: #{tpu_custom_call.1} parent=1 // pred_check
      _
    $region19: #{tpu_custom_call.1} parent=1 // pred_check_branch
      %60 = sbr.rel (0) target = $region21
    $region20: #{tpu_custom_call.1} parent=1 // pred_region
      %s62 = ssub.s32 256, 256
      %63 = vsyncadd [#allocation12], %s62
      %s64 = sshll.u32 [#allocation13], 4
      %s65 = int_to_ptr.vmem [resolvable:$true] %s64
      %70 = dma.hbm_to_vmem [thread:$0]  %s4, 256, %s65, [#allocation12], 128, 128, 8
    $region21: #{tpu_custom_call.1} parent=1 // pred_fallthru
      _
    // Predicated region
    $region22: #{tpu_custom_call.1} parent=1 // pred_check
      _
    $region23: #{tpu_custom_call.1} parent=1 // pred_check_branch
      %72 = sbr.rel (0) target = $region25
    $region24: #{tpu_custom_call.1} parent=1 // pred_region
      %73 = dma.done [#allocation5], 16384
    $region25: #{tpu_custom_call.1} parent=1 // pred_fallthru
      _
    // Predicated region
    $region26: #{tpu_custom_call.1} parent=1 // pred_check
      _
    $region27: #{tpu_custom_call.1} parent=1 // pred_check_branch
      %75 = sbr.rel (0) target = $region29
    $region28: #{tpu_custom_call.1} parent=1 // pred_region
      %76 = dma.done [#allocation7], 16
    $region29: #{tpu_custom_call.1} parent=1 // pred_fallthru
      _
    // Predicated region
    $region30: #{tpu_custom_call.1} parent=1 // pred_check
      _
    $region31: #{tpu_custom_call.1} parent=1 // pred_check_branch
      %78 = sbr.rel (0) target = $region33
    $region32: #{tpu_custom_call.1} parent=1 // pred_region
      %79 = dma.done [#allocation10], 16
    $region33: #{tpu_custom_call.1} parent=1 // pred_fallthru
      _
    // Predicated region
    $region34: #{tpu_custom_call.1} parent=1 // pred_check
      _
    $region35: #{tpu_custom_call.1} parent=1 // pred_check_branch
      %81 = sbr.rel (0) target = $region37
    $region36: #{tpu_custom_call.1} parent=1 // pred_region
      %82 = dma.done [#allocation12], 1536
    $region37: #{tpu_custom_call.1} parent=1 // pred_fallthru
      _
    // Predicated region
    $region38: #{tpu_custom_call.1} parent=1 // pred_check
      _
    $region39: #{tpu_custom_call.1} parent=1 // pred_check_branch
      %84 = sbr.rel (0) target = $region41
    $region40: #{tpu_custom_call.1} parent=1 // pred_region
      %85 = dma.done [#allocation12], 256
    $region41: #{tpu_custom_call.1} parent=1 // pred_fallthru
      _
    %86 = sfence
    %v87 = vld [vmem:[#allocation4 + $0x1] sm:$0xff]
    %v88 = vld [vmem:[#allocation4 + $0x9] sm:$0x7f]
    %v89 = vld [vmem:[#allocation4 + $0x11] sm:$0xff]
    %v90 = vld [vmem:[#allocation4 + $0x19] sm:$0x7f]
    %v91 = vld [vmem:[#allocation4 + $0x21] sm:$0xff]
    %v92 = vld [vmem:[#allocation4 + $0x29] sm:$0x7f]
    %v93 = vld [vmem:[#allocation4 + $0x31] sm:$0xff]
    %v94 = vld [vmem:[#allocation4 + $0x39] sm:$0x7f]
    %v95 = vld [vmem:[#allocation4 + $0x41] sm:$0xff]
    %v96 = vld [vmem:[#allocation4 + $0x49] sm:$0x7f]
    %v97 = vld [vmem:[#allocation4 + $0x51] sm:$0xff]
    %v98 = vld [vmem:[#allocation4 + $0x59] sm:$0x7f]
    %v99 = vld [vmem:[#allocation4 + $0x61] sm:$0xff]
    %v100 = vld [vmem:[#allocation4 + $0x69] sm:$0x7f]
    %v101 = vld [vmem:[#allocation4 + $0x71] sm:$0xff]
    %v102 = vld [vmem:[#allocation4 + $0x79] sm:$0x7f]
    %v103 = vld [vmem:[#allocation4 + $0x81] sm:$0xff]
    %v104 = vld [vmem:[#allocation4 + $0x89] sm:$0x7f]
    %v105 = vld [vmem:[#allocation4 + $0x91] sm:$0xff]
    %v106 = vld [vmem:[#allocation4 + $0x99] sm:$0x7f]
    %v107 = vld [vmem:[#allocation4 + $0xa1] sm:$0xff]
    %v108 = vld [vmem:[#allocation4 + $0xa9] sm:$0x7f]
    %v109 = vld [vmem:[#allocation4 + $0xb1] sm:$0xff]
    %v110 = vld [vmem:[#allocation4 + $0xb9] sm:$0x7f]
    %v111 = vld [vmem:[#allocation4 + $0xc1] sm:$0xff]
    %v112 = vld [vmem:[#allocation4 + $0xc9] sm:$0x7f]
    %v113 = vld [vmem:[#allocation4 + $0xd1] sm:$0xff]
    %v114 = vld [vmem:[#allocation4 + $0xd9] sm:$0x7f]
    %v115 = vld [vmem:[#allocation4 + $0xe1] sm:$0xff]
    %v116 = vld [vmem:[#allocation4 + $0xe9] sm:$0x7f]
    %v117 = vld [vmem:[#allocation4 + $0xf1] sm:$0xff]
    %v118 = vld [vmem:[#allocation4 + $0xf9] sm:$0x7f]
    %119 = vst [vmem:[#allocation2] sm:$0xff] %v87
    %120 = vst [vmem:[#allocation2 + $0x8] sm:$0x7f] %v88
    %121 = vst [vmem:[#allocation2 + $0x10] sm:$0xff] %v89
    %122 = vst [vmem:[#allocation2 + $0x18] sm:$0x7f] %v90
    %123 = vst [vmem:[#allocation2 + $0x20] sm:$0xff] %v91
    %124 = vst [vmem:[#allocation2 + $0x28] sm:$0x7f] %v92
    %125 = vst [vmem:[#allocation2 + $0x30] sm:$0xff] %v93
    %126 = vst [vmem:[#allocation2 + $0x38] sm:$0x7f] %v94
    %127 = vst [vmem:[#allocation2 + $0x40] sm:$0xff] %v95
    %128 = vst [vmem:[#allocation2 + $0x48] sm:$0x7f] %v96
    %129 = vst [vmem:[#allocation2 + $0x50] sm:$0xff] %v97
    %130 = vst [vmem:[#allocation2 + $0x58] sm:$0x7f] %v98
    %131 = vst [vmem:[#allocation2 + $0x60] sm:$0xff] %v99
    %132 = vst [vmem:[#allocation2 + $0x68] sm:$0x7f] %v100
    %133 = vst [vmem:[#allocation2 + $0x70] sm:$0xff] %v101
    %134 = vst [vmem:[#allocation2 + $0x78] sm:$0x7f] %v102
    %135 = vst [vmem:[#allocation2 + $0x80] sm:$0xff] %v103
    %136 = vst [vmem:[#allocation2 + $0x88] sm:$0x7f] %v104
    %137 = vst [vmem:[#allocation2 + $0x90] sm:$0xff] %v105
    %138 = vst [vmem:[#allocation2 + $0x98] sm:$0x7f] %v106
    %139 = vst [vmem:[#allocation2 + $0xa0] sm:$0xff] %v107
    %140 = vst [vmem:[#allocation2 + $0xa8] sm:$0x7f] %v108
    %141 = vst [vmem:[#allocation2 + $0xb0] sm:$0xff] %v109
    %142 = vst [vmem:[#allocation2 + $0xb8] sm:$0x7f] %v110
    %143 = vst [vmem:[#allocation2 + $0xc0] sm:$0xff] %v111
    %144 = vst [vmem:[#allocation2 + $0xc8] sm:$0x7f] %v112
    %145 = vst [vmem:[#allocation2 + $0xd0] sm:$0xff] %v113
    %146 = vst [vmem:[#allocation2 + $0xd8] sm:$0x7f] %v114
    %147 = vst [vmem:[#allocation2 + $0xe0] sm:$0xff] %v115
    %148 = vst [vmem:[#allocation2 + $0xe8] sm:$0x7f] %v116
    %149 = vst [vmem:[#allocation2 + $0xf0] sm:$0xff] %v117
    %150 = vst [vmem:[#allocation2 + $0xf8] sm:$0x7f] %v118
    %151 = vst [vmem:[#allocation2 + $0xf] sm:$0x1] 0.0
    %152 = vst [vmem:[#allocation2 + $0x1f] sm:$0x1] 0.0
    %153 = vst [vmem:[#allocation2 + $0x2f] sm:$0x1] 0.0
    %154 = vst [vmem:[#allocation2 + $0x3f] sm:$0x1] 0.0
    %155 = vst [vmem:[#allocation2 + $0x4f] sm:$0x1] 0.0
    %156 = vst [vmem:[#allocation2 + $0x5f] sm:$0x1] 0.0
    %157 = vst [vmem:[#allocation2 + $0x6f] sm:$0x1] 0.0
    %158 = vst [vmem:[#allocation2 + $0x7f] sm:$0x1] 0.0
    %159 = vst [vmem:[#allocation2 + $0x8f] sm:$0x1] 0.0
    %160 = vst [vmem:[#allocation2 + $0x9f] sm:$0x1] 0.0
    %161 = vst [vmem:[#allocation2 + $0xaf] sm:$0x1] 0.0
    %162 = vst [vmem:[#allocation2 + $0xbf] sm:$0x1] 0.0
    %163 = vst [vmem:[#allocation2 + $0xcf] sm:$0x1] 0.0
    %164 = vst [vmem:[#allocation2 + $0xdf] sm:$0x1] 0.0
    %165 = vst [vmem:[#allocation2 + $0xef] sm:$0x1] 0.0
    %166 = vst [vmem:[#allocation2 + $0xff] sm:$0x1] 0.0
    %s167 = scalar_lea.vmem [#allocation4], 256
    %v168 = vld [vmem:[%s167 + $0x1] sm:$0xff]
    %v169 = vld [vmem:[%s167 + $0x9] sm:$0x7f]
    %v170 = vld [vmem:[%s167 + $0x11] sm:$0xff]
    %v171 = vld [vmem:[%s167 + $0x19] sm:$0x7f]
    %v172 = vld [vmem:[%s167 + $0x21] sm:$0xff]
    %v173 = vld [vmem:[%s167 + $0x29] sm:$0x7f]
    %v174 = vld [vmem:[%s167 + $0x31] sm:$0xff]
    %v175 = vld [vmem:[%s167 + $0x39] sm:$0x7f]
    %v176 = vld [vmem:[%s167 + $0x41] sm:$0xff]
    %v177 = vld [vmem:[%s167 + $0x49] sm:$0x7f]
    %v178 = vld [vmem:[%s167 + $0x51] sm:$0xff]
    %v179 = vld [vmem:[%s167 + $0x59] sm:$0x7f]
    %v180 = vld [vmem:[%s167 + $0x61] sm:$0xff]
    %v181 = vld [vmem:[%s167 + $0x69] sm:$0x7f]
    %v182 = vld [vmem:[%s167 + $0x71] sm:$0xff]
    %v183 = vld [vmem:[%s167 + $0x79] sm:$0x7f]
    %v184 = vld [vmem:[%s167 + $0x81] sm:$0xff]
    %v185 = vld [vmem:[%s167 + $0x89] sm:$0x7f]
    %v186 = vld [vmem:[%s167 + $0x91] sm:$0xff]
    %v187 = vld [vmem:[%s167 + $0x99] sm:$0x7f]
    %v188 = vld [vmem:[%s167 + $0xa1] sm:$0xff]
    %v189 = vld [vmem:[%s167 + $0xa9] sm:$0x7f]
    %v190 = vld [vmem:[%s167 + $0xb1] sm:$0xff]
    %v191 = vld [vmem:[%s167 + $0xb9] sm:$0x7f]
    %v192 = vld [vmem:[%s167 + $0xc1] sm:$0xff]
    %v193 = vld [vmem:[%s167 + $0xc9] sm:$0x7f]
    %v194 = vld [vmem:[%s167 + $0xd1] sm:$0xff]
    %v195 = vld [vmem:[%s167 + $0xd9] sm:$0x7f]
    %v196 = vld [vmem:[%s167 + $0xe1] sm:$0xff]
    %v197 = vld [vmem:[%s167 + $0xe9] sm:$0x7f]
    %v198 = vld [vmem:[%s167 + $0xf1] sm:$0xff]
    %v199 = vld [vmem:[%s167 + $0xf9] sm:$0x7f]
    %s200 = scalar_lea.vmem [#allocation2], 256
    %201 = vst [vmem:[%s200] sm:$0xff] %v168
    %202 = vst [vmem:[%s200 + $0x8] sm:$0x7f] %v169
    %203 = vst [vmem:[%s200 + $0x10] sm:$0xff] %v170
    %204 = vst [vmem:[%s200 + $0x18] sm:$0x7f] %v171
    %205 = vst [vmem:[%s200 + $0x20] sm:$0xff] %v172
    %206 = vst [vmem:[%s200 + $0x28] sm:$0x7f] %v173
    %207 = vst [vmem:[%s200 + $0x30] sm:$0xff] %v174
    %208 = vst [vmem:[%s200 + $0x38] sm:$0x7f] %v175
    %209 = vst [vmem:[%s200 + $0x40] sm:$0xff] %v176
    %210 = vst [vmem:[%s200 + $0x48] sm:$0x7f] %v177
    %211 = vst [vmem:[%s200 + $0x50] sm:$0xff] %v178
    %212 = vst [vmem:[%s200 + $0x58] sm:$0x7f] %v179
    %213 = vst [vmem:[%s200 + $0x60] sm:$0xff] %v180
    %214 = vst [vmem:[%s200 + $0x68] sm:$0x7f] %v181
    %215 = vst [vmem:[%s200 + $0x70] sm:$0xff] %v182
    %216 = vst [vmem:[%s200 + $0x78] sm:$0x7f] %v183
    %217 = vst [vmem:[%s200 + $0x80] sm:$0xff] %v184
    %218 = vst [vmem:[%s200 + $0x88] sm:$0x7f] %v185
    %219 = vst [vmem:[%s200 + $0x90] sm:$0xff] %v186
    %220 = vst [vmem:[%s200 + $0x98] sm:$0x7f] %v187
    %221 = vst [vmem:[%s200 + $0xa0] sm:$0xff] %v188
    %222 = vst [vmem:[%s200 + $0xa8] sm:$0x7f] %v189
    %223 = vst [vmem:[%s200 + $0xb0] sm:$0xff] %v190
    %224 = vst [vmem:[%s200 + $0xb8] sm:$0x7f] %v191
    %225 = vst [vmem:[%s200 + $0xc0] sm:$0xff] %v192
    %226 = vst [vmem:[%s200 + $0xc8] sm:$0x7f] %v193
    %227 = vst [vmem:[%s200 + $0xd0] sm:$0xff] %v194
    %228 = vst [vmem:[%s200 + $0xd8] sm:$0x7f] %v195
    %229 = vst [vmem:[%s200 + $0xe0] sm:$0xff] %v196
    %230 = vst [vmem:[%s200 + $0xe8] sm:$0x7f] %v197
    %231 = vst [vmem:[%s200 + $0xf0] sm:$0xff] %v198
    %232 = vst [vmem:[%s200 + $0xf8] sm:$0x7f] %v199
    %233 = vst [vmem:[%s200 + $0xf] sm:$0x1] 0.0
    %234 = vst [vmem:[%s200 + $0x1f] sm:$0x1] 0.0
    %235 = vst [vmem:[%s200 + $0x2f] sm:$0x1] 0.0
    %236 = vst [vmem:[%s200 + $0x3f] sm:$0x1] 0.0
    %237 = vst [vmem:[%s200 + $0x4f] sm:$0x1] 0.0
    %238 = vst [vmem:[%s200 + $0x5f] sm:$0x1] 0.0
    %239 = vst [vmem:[%s200 + $0x6f] sm:$0x1] 0.0
    %240 = vst [vmem:[%s200 + $0x7f] sm:$0x1] 0.0
    %241 = vst [vmem:[%s200 + $0x8f] sm:$0x1] 0.0
    %242 = vst [vmem:[%s200 + $0x9f] sm:$0x1] 0.0
    %243 = vst [vmem:[%s200 + $0xaf] sm:$0x1] 0.0
    %244 = vst [vmem:[%s200 + $0xbf] sm:$0x1] 0.0
    %245 = vst [vmem:[%s200 + $0xcf] sm:$0x1] 0.0
    %246 = vst [vmem:[%s200 + $0xdf] sm:$0x1] 0.0
    %247 = vst [vmem:[%s200 + $0xef] sm:$0x1] 0.0
    %248 = vst [vmem:[%s200 + $0xff] sm:$0x1] 0.0
    %s249 = scalar_lea.vmem [#allocation4], 512
    %v250 = vld [vmem:[%s249 + $0x1] sm:$0xff]
    %v251 = vld [vmem:[%s249 + $0x9] sm:$0x7f]
    %v252 = vld [vmem:[%s249 + $0x11] sm:$0xff]
    %v253 = vld [vmem:[%s249 + $0x19] sm:$0x7f]
    %v254 = vld [vmem:[%s249 + $0x21] sm:$0xff]
    %v255 = vld [vmem:[%s249 + $0x29] sm:$0x7f]
    %v256 = vld [vmem:[%s249 + $0x31] sm:$0xff]
    %v257 = vld [vmem:[%s249 + $0x39] sm:$0x7f]
    %v258 = vld [vmem:[%s249 + $0x41] sm:$0xff]
    %v259 = vld [vmem:[%s249 + $0x49] sm:$0x7f]
    %v260 = vld [vmem:[%s249 + $0x51] sm:$0xff]
    %v261 = vld [vmem:[%s249 + $0x59] sm:$0x7f]
    %v262 = vld [vmem:[%s249 + $0x61] sm:$0xff]
    %v263 = vld [vmem:[%s249 + $0x69] sm:$0x7f]
    %v264 = vld [vmem:[%s249 + $0x71] sm:$0xff]
    %v265 = vld [vmem:[%s249 + $0x79] sm:$0x7f]
    %v266 = vld [vmem:[%s249 + $0x81] sm:$0xff]
    %v267 = vld [vmem:[%s249 + $0x89] sm:$0x7f]
    %v268 = vld [vmem:[%s249 + $0x91] sm:$0xff]
    %v269 = vld [vmem:[%s249 + $0x99] sm:$0x7f]
    %v270 = vld [vmem:[%s249 + $0xa1] sm:$0xff]
    %v271 = vld [vmem:[%s249 + $0xa9] sm:$0x7f]
    %v272 = vld [vmem:[%s249 + $0xb1] sm:$0xff]
    %v273 = vld [vmem:[%s249 + $0xb9] sm:$0x7f]
    %v274 = vld [vmem:[%s249 + $0xc1] sm:$0xff]
    %v275 = vld [vmem:[%s249 + $0xc9] sm:$0x7f]
    %v276 = vld [vmem:[%s249 + $0xd1] sm:$0xff]
    %v277 = vld [vmem:[%s249 + $0xd9] sm:$0x7f]
    %v278 = vld [vmem:[%s249 + $0xe1] sm:$0xff]
    %v279 = vld [vmem:[%s249 + $0xe9] sm:$0x7f]
    %v280 = vld [vmem:[%s249 + $0xf1] sm:$0xff]
    %v281 = vld [vmem:[%s249 + $0xf9] sm:$0x7f]
    %s282 = scalar_lea.vmem [#allocation2], 512
    %283 = vst [vmem:[%s282] sm:$0xff] %v250
    %284 = vst [vmem:[%s282 + $0x8] sm:$0x7f] %v251
    %285 = vst [vmem:[%s282 + $0x10] sm:$0xff] %v252
    %286 = vst [vmem:[%s282 + $0x18] sm:$0x7f] %v253
    %287 = vst [vmem:[%s282 + $0x20] sm:$0xff] %v254
    %288 = vst [vmem:[%s282 + $0x28] sm:$0x7f] %v255
    %289 = vst [vmem:[%s282 + $0x30] sm:$0xff] %v256
    %290 = vst [vmem:[%s282 + $0x38] sm:$0x7f] %v257
    %291 = vst [vmem:[%s282 + $0x40] sm:$0xff] %v258
    %292 = vst [vmem:[%s282 + $0x48] sm:$0x7f] %v259
    %293 = vst [vmem:[%s282 + $0x50] sm:$0xff] %v260
    %294 = vst [vmem:[%s282 + $0x58] sm:$0x7f] %v261
    %295 = vst [vmem:[%s282 + $0x60] sm:$0xff] %v262
    %296 = vst [vmem:[%s282 + $0x68] sm:$0x7f] %v263
    %297 = vst [vmem:[%s282 + $0x70] sm:$0xff] %v264
    %298 = vst [vmem:[%s282 + $0x78] sm:$0x7f] %v265
    %299 = vst [vmem:[%s282 + $0x80] sm:$0xff] %v266
    %300 = vst [vmem:[%s282 + $0x88] sm:$0x7f] %v267
    %301 = vst [vmem:[%s282 + $0x90] sm:$0xff] %v268
    %302 = vst [vmem:[%s282 + $0x98] sm:$0x7f] %v269
    %303 = vst [vmem:[%s282 + $0xa0] sm:$0xff] %v270
    %304 = vst [vmem:[%s282 + $0xa8] sm:$0x7f] %v271
    %305 = vst [vmem:[%s282 + $0xb0] sm:$0xff] %v272
    %306 = vst [vmem:[%s282 + $0xb8] sm:$0x7f] %v273
    %307 = vst [vmem:[%s282 + $0xc0] sm:$0xff] %v274
    %308 = vst [vmem:[%s282 + $0xc8] sm:$0x7f] %v275
    %309 = vst [vmem:[%s282 + $0xd0] sm:$0xff] %v276
    %310 = vst [vmem:[%s282 + $0xd8] sm:$0x7f] %v277
    %311 = vst [vmem:[%s282 + $0xe0] sm:$0xff] %v278
    %312 = vst [vmem:[%s282 + $0xe8] sm:$0x7f] %v279
    %313 = vst [vmem:[%s282 + $0xf0] sm:$0xff] %v280
    %314 = vst [vmem:[%s282 + $0xf8] sm:$0x7f] %v281
    %315 = vst [vmem:[%s282 + $0xf] sm:$0x1] 0.0
    %316 = vst [vmem:[%s282 + $0x1f] sm:$0x1] 0.0
    %317 = vst [vmem:[%s282 + $0x2f] sm:$0x1] 0.0
    %318 = vst [vmem:[%s282 + $0x3f] sm:$0x1] 0.0
    %319 = vst [vmem:[%s282 + $0x4f] sm:$0x1] 0.0
    %320 = vst [vmem:[%s282 + $0x5f] sm:$0x1] 0.0
    %321 = vst [vmem:[%s282 + $0x6f] sm:$0x1] 0.0
    %322 = vst [vmem:[%s282 + $0x7f] sm:$0x1] 0.0
    %323 = vst [vmem:[%s282 + $0x8f] sm:$0x1] 0.0
    %324 = vst [vmem:[%s282 + $0x9f] sm:$0x1] 0.0
    %325 = vst [vmem:[%s282 + $0xaf] sm:$0x1] 0.0
    %326 = vst [vmem:[%s282 + $0xbf] sm:$0x1] 0.0
    %327 = vst [vmem:[%s282 + $0xcf] sm:$0x1] 0.0
    %328 = vst [vmem:[%s282 + $0xdf] sm:$0x1] 0.0
    %329 = vst [vmem:[%s282 + $0xef] sm:$0x1] 0.0
    %330 = vst [vmem:[%s282 + $0xff] sm:$0x1] 0.0
    %s331 = scalar_lea.vmem [#allocation4], 768
    %v332 = vld [vmem:[%s331 + $0x1] sm:$0xff]
    %v333 = vld [vmem:[%s331 + $0x9] sm:$0x7f]
    %v334 = vld [vmem:[%s331 + $0x11] sm:$0xff]
    %v335 = vld [vmem:[%s331 + $0x19] sm:$0x7f]
    %v336 = vld [vmem:[%s331 + $0x21] sm:$0xff]
    %v337 = vld [vmem:[%s331 + $0x29] sm:$0x7f]
    %v338 = vld [vmem:[%s331 + $0x31] sm:$0xff]
    %v339 = vld [vmem:[%s331 + $0x39] sm:$0x7f]
    %v340 = vld [vmem:[%s331 + $0x41] sm:$0xff]
    %v341 = vld [vmem:[%s331 + $0x49] sm:$0x7f]
    %v342 = vld [vmem:[%s331 + $0x51] sm:$0xff]
    %v343 = vld [vmem:[%s331 + $0x59] sm:$0x7f]
    %v344 = vld [vmem:[%s331 + $0x61] sm:$0xff]
    %v345 = vld [vmem:[%s331 + $0x69] sm:$0x7f]
    %v346 = vld [vmem:[%s331 + $0x71] sm:$0xff]
    %v347 = vld [vmem:[%s331 + $0x79] sm:$0x7f]
    %v348 = vld [vmem:[%s331 + $0x81] sm:$0xff]
    %v349 = vld [vmem:[%s331 + $0x89] sm:$0x7f]
    %v350 = vld [vmem:[%s331 + $0x91] sm:$0xff]
    %v351 = vld [vmem:[%s331 + $0x99] sm:$0x7f]
    %v352 = vld [vmem:[%s331 + $0xa1] sm:$0xff]
    %v353 = vld [vmem:[%s331 + $0xa9] sm:$0x7f]
    %v354 = vld [vmem:[%s331 + $0xb1] sm:$0xff]
    %v355 = vld [vmem:[%s331 + $0xb9] sm:$0x7f]
    %v356 = vld [vmem:[%s331 + $0xc1] sm:$0xff]
    %v357 = vld [vmem:[%s331 + $0xc9] sm:$0x7f]
    %v358 = vld [vmem:[%s331 + $0xd1] sm:$0xff]
    %v359 = vld [vmem:[%s331 + $0xd9] sm:$0x7f]
    %v360 = vld [vmem:[%s331 + $0xe1] sm:$0xff]
    %v361 = vld [vmem:[%s331 + $0xe9] sm:$0x7f]
    %v362 = vld [vmem:[%s331 + $0xf1] sm:$0xff]
    %v363 = vld [vmem:[%s331 + $0xf9] sm:$0x7f]
    %s364 = scalar_lea.vmem [#allocation2], 768
    %365 = vst [vmem:[%s364] sm:$0xff] %v332
    %366 = vst [vmem:[%s364 + $0x8] sm:$0x7f] %v333
    %367 = vst [vmem:[%s364 + $0x10] sm:$0xff] %v334
    %368 = vst [vmem:[%s364 + $0x18] sm:$0x7f] %v335
    %369 = vst [vmem:[%s364 + $0x20] sm:$0xff] %v336
    %370 = vst [vmem:[%s364 + $0x28] sm:$0x7f] %v337
    %371 = vst [vmem:[%s364 + $0x30] sm:$0xff] %v338
    %372 = vst [vmem:[%s364 + $0x38] sm:$0x7f] %v339
    %373 = vst [vmem:[%s364 + $0x40] sm:$0xff] %v340
    %374 = vst [vmem:[%s364 + $0x48] sm:$0x7f] %v341
    %375 = vst [vmem:[%s364 + $0x50] sm:$0xff] %v342
    %376 = vst [vmem:[%s364 + $0x58] sm:$0x7f] %v343
    %377 = vst [vmem:[%s364 + $0x60] sm:$0xff] %v344
    %378 = vst [vmem:[%s364 + $0x68] sm:$0x7f] %v345
    %379 = vst [vmem:[%s364 + $0x70] sm:$0xff] %v346
    %380 = vst [vmem:[%s364 + $0x78] sm:$0x7f] %v347
    %381 = vst [vmem:[%s364 + $0x80] sm:$0xff] %v348
    %382 = vst [vmem:[%s364 + $0x88] sm:$0x7f] %v349
    %383 = vst [vmem:[%s364 + $0x90] sm:$0xff] %v350
    %384 = vst [vmem:[%s364 + $0x98] sm:$0x7f] %v351
    %385 = vst [vmem:[%s364 + $0xa0] sm:$0xff] %v352
    %386 = vst [vmem:[%s364 + $0xa8] sm:$0x7f] %v353
    %387 = vst [vmem:[%s364 + $0xb0] sm:$0xff] %v354
    %388 = vst [vmem:[%s364 + $0xb8] sm:$0x7f] %v355
    %389 = vst [vmem:[%s364 + $0xc0] sm:$0xff] %v356
    %390 = vst [vmem:[%s364 + $0xc8] sm:$0x7f] %v357
    %391 = vst [vmem:[%s364 + $0xd0] sm:$0xff] %v358
    %392 = vst [vmem:[%s364 + $0xd8] sm:$0x7f] %v359
    %393 = vst [vmem:[%s364 + $0xe0] sm:$0xff] %v360
    %394 = vst [vmem:[%s364 + $0xe8] sm:$0x7f] %v361
    %395 = vst [vmem:[%s364 + $0xf0] sm:$0xff] %v362
    %396 = vst [vmem:[%s364 + $0xf8] sm:$0x7f] %v363
    %397 = vst [vmem:[%s364 + $0xf] sm:$0x1] 0.0
    %398 = vst [vmem:[%s364 + $0x1f] sm:$0x1] 0.0
    %399 = vst [vmem:[%s364 + $0x2f] sm:$0x1] 0.0
    %400 = vst [vmem:[%s364 + $0x3f] sm:$0x1] 0.0
    %401 = vst [vmem:[%s364 + $0x4f] sm:$0x1] 0.0
    %402 = vst [vmem:[%s364 + $0x5f] sm:$0x1] 0.0
    %403 = vst [vmem:[%s364 + $0x6f] sm:$0x1] 0.0
    %404 = vst [vmem:[%s364 + $0x7f] sm:$0x1] 0.0
    %405 = vst [vmem:[%s364 + $0x8f] sm:$0x1] 0.0
    %406 = vst [vmem:[%s364 + $0x9f] sm:$0x1] 0.0
    %407 = vst [vmem:[%s364 + $0xaf] sm:$0x1] 0.0
    %408 = vst [vmem:[%s364 + $0xbf] sm:$0x1] 0.0
    %409 = vst [vmem:[%s364 + $0xcf] sm:$0x1] 0.0
    %410 = vst [vmem:[%s364 + $0xdf] sm:$0x1] 0.0
    %411 = vst [vmem:[%s364 + $0xef] sm:$0x1] 0.0
    %412 = vst [vmem:[%s364 + $0xff] sm:$0x1] 0.0
    %s413 = sld [smem:[#allocation8]]
    %s414 = sld [smem:[#allocation8 + $0x1]]
    %s415 = sld [smem:[#allocation8 + $0x2]]
    %s416 = sld [smem:[#allocation8 + $0x3]]
    %s417 = sld [smem:[#allocation8 + $0x4]]
    %s418 = sld [smem:[#allocation8 + $0x5]]
    %s419 = sld [smem:[#allocation8 + $0x6]]
    %s420 = sld [smem:[#allocation8 + $0x7]]
    %s421 = sld [smem:[#allocation8 + $0x8]]
    %s422 = sld [smem:[#allocation8 + $0x9]]
    %s423 = sld [smem:[#allocation8 + $0xa]]
    %s424 = sld [smem:[#allocation8 + $0xb]]
    %s425 = sld [smem:[#allocation8 + $0xc]]
    %s426 = sld [smem:[#allocation8 + $0xd]]
    %s427 = sld [smem:[#allocation8 + $0xe]]
    %s428 = sld [smem:[#allocation8 + $0xf]]
    %s429 = sld [smem:[#allocation8 + $0x10]]
    %s430 = sld [smem:[#allocation8 + $0x11]]
    %s431 = sld [smem:[#allocation8 + $0x12]]
    %s432 = sld [smem:[#allocation8 + $0x13]]
    %s433 = sld [smem:[#allocation8 + $0x14]]
    %s434 = sld [smem:[#allocation8 + $0x15]]
    %s435 = sld [smem:[#allocation8 + $0x16]]
    %s436 = sld [smem:[#allocation8 + $0x17]]
    %s437 = sld [smem:[#allocation8 + $0x18]]
    %s438 = sld [smem:[#allocation8 + $0x19]]
    %s439 = sld [smem:[#allocation8 + $0x1a]]
    %s440 = sld [smem:[#allocation9]]
    %s441 = sld [smem:[#allocation9 + $0x1]]
    %s442 = sld [smem:[#allocation9 + $0x2]]
    loop: start=0, step=1, limit=15
    $region42: #{tpu_custom_call.1} parent=1 // loop_pre_header
      _
    $region43: #{tpu_custom_call.1} parent=1 // loop_header
      %s444 = sphi 0, %s448
      %p445 = scmp.ge.s32.totalorder %s444, 15
    $region44: #{tpu_custom_call.1} parent=1 // loop_header_branch
      %447 = sbr.rel (%p445) target = $region48
    $region45: #{tpu_custom_call.1} parent=1 // loop_body
      %s449 = smul.u32 %s444, 16
      %s450 = scalar_lea.vmem [#allocation4], %s449
      %v451 = vld [vmem:[%s450] sm:$0xff]
      %v452 = vld [vmem:[%s450 + $0x8] sm:$0xff]
      %v453 = vstv %s413
      %v454 = vmul.f32 %v451, %v453
      %v455 = vmul.f32 %v452, %v453
      %v456 = vstv %s422
      %v457 = vmul.f32 %v451, %v456
      %v458 = vmul.f32 %v452, %v456
      %v459 = vstv %s431
      %v460 = vmul.f32 %v451, %v459
      %v461 = vmul.f32 %v452, %v459
      %s462 = sadd.s32 %s449, 256
      %s463 = scalar_lea.vmem [#allocation4], %s462
      %v464 = vld [vmem:[%s463] sm:$0xff]
      %v465 = vld [vmem:[%s463 + $0x8] sm:$0xff]
      %v466 = vstv %s414
      %v467 = vmul.f32 %v464, %v466
      %v468 = vmul.f32 %v465, %v466
      %v469 = vadd.f32 %v454, %v467
      %v470 = vadd.f32 %v455, %v468
      %v471 = vstv %s423
      %v472 = vmul.f32 %v464, %v471
      %v473 = vmul.f32 %v465, %v471
      %v474 = vadd.f32 %v457, %v472
      %v475 = vadd.f32 %v458, %v473
      %v476 = vstv %s432
      %v477 = vmul.f32 %v464, %v476
      %v478 = vmul.f32 %v465, %v476
      %v479 = vadd.f32 %v460, %v477
      %v480 = vadd.f32 %v461, %v478
      %s481 = scalar_lea.vmem [#allocation2], %s449
      %v482 = vld [vmem:[%s481] sm:$0xff]
      %v483 = vld [vmem:[%s481 + $0x8] sm:$0xff]
      %v484 = vstv %s415
      %v485 = vmul.f32 %v482, %v484
      %v486 = vmul.f32 %v483, %v484
      %v487 = vadd.f32 %v469, %v485
      %v488 = vadd.f32 %v470, %v486
      %v489 = vstv %s424
      %v490 = vmul.f32 %v482, %v489
      %v491 = vmul.f32 %v483, %v489
      %v492 = vadd.f32 %v474, %v490
      %v493 = vadd.f32 %v475, %v491
      %v494 = vstv %s433
      %v495 = vmul.f32 %v482, %v494
      %v496 = vmul.f32 %v483, %v494
      %v497 = vadd.f32 %v479, %v495
      %v498 = vadd.f32 %v480, %v496
      %s499 = sadd.s32 %s449, 512
      %s500 = scalar_lea.vmem [#allocation4], %s499
      %v501 = vld [vmem:[%s500] sm:$0xff]
      %v502 = vld [vmem:[%s500 + $0x8] sm:$0xff]
      %v503 = vstv %s416
      %v504 = vmul.f32 %v501, %v503
      %v505 = vmul.f32 %v502, %v503
      %v506 = vadd.f32 %v487, %v504
      %v507 = vadd.f32 %v488, %v505
      %v508 = vstv %s425
      %v509 = vmul.f32 %v501, %v508
      %v510 = vmul.f32 %v502, %v508
      %v511 = vadd.f32 %v492, %v509
      %v512 = vadd.f32 %v493, %v510
      %v513 = vstv %s434
      %v514 = vmul.f32 %v501, %v513
      %v515 = vmul.f32 %v502, %v513
      %v516 = vadd.f32 %v497, %v514
      %v517 = vadd.f32 %v498, %v515
      %s518 = sadd.s32 %s449, 768
      %s519 = scalar_lea.vmem [#allocation4], %s518
      %v520 = vld [vmem:[%s519] sm:$0xff]
      %v521 = vld [vmem:[%s519 + $0x8] sm:$0xff]
      %v522 = vstv %s417
      %v523 = vmul.f32 %v520, %v522
      %v524 = vmul.f32 %v521, %v522
      %v525 = vadd.f32 %v506, %v523
      %v526 = vadd.f32 %v507, %v524
      %v527 = vstv %s426
      %v528 = vmul.f32 %v520, %v527
      %v529 = vmul.f32 %v521, %v527
      %v530 = vadd.f32 %v511, %v528
      %v531 = vadd.f32 %v512, %v529
      %v532 = vstv %s435
      %v533 = vmul.f32 %v520, %v532
      %v534 = vmul.f32 %v521, %v532
      %v535 = vadd.f32 %v516, %v533
      %v536 = vadd.f32 %v517, %v534
      %s537 = scalar_lea.vmem [#allocation2], %s499
      %v538 = vld [vmem:[%s537] sm:$0xff]
      %v539 = vld [vmem:[%s537 + $0x8] sm:$0xff]
      %v540 = vstv %s418
      %v541 = vmul.f32 %v538, %v540
      %v542 = vmul.f32 %v539, %v540
      %v543 = vadd.f32 %v525, %v541
      %v544 = vadd.f32 %v526, %v542
      %v545 = vstv %s427
      %v546 = vmul.f32 %v538, %v545
      %v547 = vmul.f32 %v539, %v545
      %v548 = vadd.f32 %v530, %v546
      %v549 = vadd.f32 %v531, %v547
      %v550 = vstv %s436
      %v551 = vmul.f32 %v538, %v550
      %v552 = vmul.f32 %v539, %v550
      %v553 = vadd.f32 %v535, %v551
      %v554 = vadd.f32 %v536, %v552
      %s555 = sadd.s32 %s444, 1
      %s556 = smul.u32 %s555, 16
      %s557 = scalar_lea.vmem [#allocation4], %s556
      %v558 = vld [vmem:[%s557] sm:$0xff]
      %v559 = vld [vmem:[%s557 + $0x8] sm:$0xff]
      %v560 = vstv %s419
      %v561 = vmul.f32 %v558, %v560
      %v562 = vmul.f32 %v559, %v560
      %v563 = vadd.f32 %v543, %v561
      %v564 = vadd.f32 %v544, %v562
      %v565 = vstv %s428
      %v566 = vmul.f32 %v558, %v565
      %v567 = vmul.f32 %v559, %v565
      %v568 = vadd.f32 %v548, %v566
      %v569 = vadd.f32 %v549, %v567
      %v570 = vstv %s437
      %v571 = vmul.f32 %v558, %v570
      %v572 = vmul.f32 %v559, %v570
      %v573 = vadd.f32 %v553, %v571
      %v574 = vadd.f32 %v554, %v572
      %s575 = sadd.s32 %s556, 256
      %s576 = scalar_lea.vmem [#allocation4], %s575
      %v577 = vld [vmem:[%s576] sm:$0xff]
      %v578 = vld [vmem:[%s576 + $0x8] sm:$0xff]
      %v579 = vstv %s420
      %v580 = vmul.f32 %v577, %v579
      %v581 = vmul.f32 %v578, %v579
      %v582 = vadd.f32 %v563, %v580
      %v583 = vadd.f32 %v564, %v581
      %v584 = vstv %s429
      %v585 = vmul.f32 %v577, %v584
      %v586 = vmul.f32 %v578, %v584
      %v587 = vadd.f32 %v568, %v585
      %v588 = vadd.f32 %v569, %v586
      %v589 = vstv %s438
      %v590 = vmul.f32 %v577, %v589
      %v591 = vmul.f32 %v578, %v589
      %v592 = vadd.f32 %v573, %v590
      %v593 = vadd.f32 %v574, %v591
      %s594 = scalar_lea.vmem [#allocation2], %s556
      %v595 = vld [vmem:[%s594] sm:$0xff]
      %v596 = vld [vmem:[%s594 + $0x8] sm:$0xff]
      %v597 = vstv %s421
      %v598 = vmul.f32 %v595, %v597
      %v599 = vmul.f32 %v596, %v597
      %v600 = vadd.f32 %v582, %v598
      %v601 = vadd.f32 %v583, %v599
      %v602 = vstv %s430
      %v603 = vmul.f32 %v595, %v602
      %v604 = vmul.f32 %v596, %v602
      %v605 = vadd.f32 %v587, %v603
      %v606 = vadd.f32 %v588, %v604
      %v607 = vstv %s439
      %v608 = vmul.f32 %v595, %v607
      %v609 = vmul.f32 %v596, %v607
      %v610 = vadd.f32 %v592, %v608
      %v611 = vadd.f32 %v593, %v609
      %v612 = vstv %s440
      %v613 = vadd.f32 %v600, %v612
      %v614 = vadd.f32 %v601, %v612
      %v615 = vmax.f32 %v613, 0.0
      %v616 = vmax.f32 %v614, 0.0
      %v617 = vstv %s441
      %v618 = vadd.f32 %v605, %v617
      %v619 = vadd.f32 %v606, %v617
      %v620 = vmax.f32 %v618, 0.0
      %v621 = vmax.f32 %v619, 0.0
      %v622 = vstv %s442
      %v623 = vadd.f32 %v610, %v622
      %v624 = vadd.f32 %v611, %v622
      %v625 = vmax.f32 %v623, 0.0
      %v626 = vmax.f32 %v624, 0.0
      %v627 = vmul.f32 %v464, %v453
      %v628 = vmul.f32 %v465, %v453
      %v629 = vmul.f32 %v464, %v456
      %v630 = vmul.f32 %v465, %v456
      %v631 = vmul.f32 %v464, %v459
      %v632 = vmul.f32 %v465, %v459
      %v633 = vmul.f32 %v482, %v466
      %v634 = vmul.f32 %v483, %v466
      %v635 = vadd.f32 %v627, %v633
      %v636 = vadd.f32 %v628, %v634
      %v637 = vmul.f32 %v482, %v471
      %v638 = vmul.f32 %v483, %v471
      %v639 = vadd.f32 %v629, %v637
      %v640 = vadd.f32 %v630, %v638
      %v641 = vmul.f32 %v482, %v476
      %v642 = vmul.f32 %v483, %v476
      %v643 = vadd.f32 %v631, %v641
      %v644 = vadd.f32 %v632, %v642
      %s645 = scalar_lea.vmem [#allocation2], %s462
      %v646 = vld [vmem:[%s645] sm:$0xff]
      %v647 = vld [vmem:[%s645 + $0x8] sm:$0xff]
      %v648 = vmul.f32 %v646, %v484
      %v649 = vmul.f32 %v647, %v484
      %v650 = vadd.f32 %v635, %v648
      %v651 = vadd.f32 %v636, %v649
      %v652 = vmul.f32 %v646, %v489
      %v653 = vmul.f32 %v647, %v489
      %v654 = vadd.f32 %v639, %v652
      %v655 = vadd.f32 %v640, %v653
      %v656 = vmul.f32 %v646, %v494
      %v657 = vmul.f32 %v647, %v494
      %v658 = vadd.f32 %v643, %v656
      %v659 = vadd.f32 %v644, %v657
      %v660 = vmul.f32 %v520, %v503
      %v661 = vmul.f32 %v521, %v503
      %v662 = vadd.f32 %v650, %v660
      %v663 = vadd.f32 %v651, %v661
      %v664 = vmul.f32 %v520, %v508
      %v665 = vmul.f32 %v521, %v508
      %v666 = vadd.f32 %v654, %v664
      %v667 = vadd.f32 %v655, %v665
      %v668 = vmul.f32 %v520, %v513
      %v669 = vmul.f32 %v521, %v513
      %v670 = vadd.f32 %v658, %v668
      %v671 = vadd.f32 %v659, %v669
      %v672 = vmul.f32 %v538, %v522
      %v673 = vmul.f32 %v539, %v522
      %v674 = vadd.f32 %v662, %v672
      %v675 = vadd.f32 %v663, %v673
      %v676 = vmul.f32 %v538, %v527
      %v677 = vmul.f32 %v539, %v527
      %v678 = vadd.f32 %v666, %v676
      %v679 = vadd.f32 %v667, %v677
      %v680 = vmul.f32 %v538, %v532
      %v681 = vmul.f32 %v539, %v532
      %v682 = vadd.f32 %v670, %v680
      %v683 = vadd.f32 %v671, %v681
      %s684 = scalar_lea.vmem [#allocation2], %s518
      %v685 = vld [vmem:[%s684] sm:$0xff]
      %v686 = vld [vmem:[%s684 + $0x8] sm:$0xff]
      %v687 = vmul.f32 %v685, %v540
      %v688 = vmul.f32 %v686, %v540
      %v689 = vadd.f32 %v674, %v687
      %v690 = vadd.f32 %v675, %v688
      %v691 = vmul.f32 %v685, %v545
      %v692 = vmul.f32 %v686, %v545
      %v693 = vadd.f32 %v678, %v691
      %v694 = vadd.f32 %v679, %v692
      %v695 = vmul.f32 %v685, %v550
      %v696 = vmul.f32 %v686, %v550
      %v697 = vadd.f32 %v682, %v695
      %v698 = vadd.f32 %v683, %v696
      %v699 = vmul.f32 %v577, %v560
      %v700 = vmul.f32 %v578, %v560
      %v701 = vadd.f32 %v689, %v699
      %v702 = vadd.f32 %v690, %v700
      %v703 = vmul.f32 %v577, %v565
      %v704 = vmul.f32 %v578, %v565
      %v705 = vadd.f32 %v693, %v703
      %v706 = vadd.f32 %v694, %v704
      %v707 = vmul.f32 %v577, %v570
      %v708 = vmul.f32 %v578, %v570
      %v709 = vadd.f32 %v697, %v707
      %v710 = vadd.f32 %v698, %v708
      %v711 = vmul.f32 %v595, %v579
      %v712 = vmul.f32 %v596, %v579
      %v713 = vadd.f32 %v701, %v711
      %v714 = vadd.f32 %v702, %v712
      %v715 = vmul.f32 %v595, %v584
      %v716 = vmul.f32 %v596, %v584
      %v717 = vadd.f32 %v705, %v715
      %v718 = vadd.f32 %v706, %v716
      %v719 = vmul.f32 %v595, %v589
      %v720 = vmul.f32 %v596, %v589
      %v721 = vadd.f32 %v709, %v719
      %v722 = vadd.f32 %v710, %v720
      %s723 = scalar_lea.vmem [#allocation2], %s575
      %v724 = vld [vmem:[%s723] sm:$0xff]
      %v725 = vld [vmem:[%s723 + $0x8] sm:$0xff]
      %v726 = vmul.f32 %v724, %v597
      %v727 = vmul.f32 %v725, %v597
      %v728 = vadd.f32 %v713, %v726
      %v729 = vadd.f32 %v714, %v727
      %v730 = vmul.f32 %v724, %v602
      %v731 = vmul.f32 %v725, %v602
      %v732 = vadd.f32 %v717, %v730
      %v733 = vadd.f32 %v718, %v731
      %v734 = vmul.f32 %v724, %v607
      %v735 = vmul.f32 %v725, %v607
      %v736 = vadd.f32 %v721, %v734
      %v737 = vadd.f32 %v722, %v735
      %v738 = vadd.f32 %v728, %v612
      %v739 = vadd.f32 %v729, %v612
      %v740 = vmax.f32 %v738, 0.0
      %v741 = vmax.f32 %v739, 0.0
      %v742 = vmax.f32 %v615, %v740
      %v743 = vmax.f32 %v616, %v741
      %v744 = vadd.f32 %v732, %v617
      %v745 = vadd.f32 %v733, %v617
      %v746 = vmax.f32 %v744, 0.0
      %v747 = vmax.f32 %v745, 0.0
      %v748 = vmax.f32 %v620, %v746
      %v749 = vmax.f32 %v621, %v747
      %v750 = vadd.f32 %v736, %v622
      %v751 = vadd.f32 %v737, %v622
      %v752 = vmax.f32 %v750, 0.0
      %v753 = vmax.f32 %v751, 0.0
      %v754 = vmax.f32 %v625, %v752
      %v755 = vmax.f32 %v626, %v753
      %v756 = vmul.f32 %v501, %v453
      %v757 = vmul.f32 %v502, %v453
      %v758 = vmul.f32 %v501, %v456
      %v759 = vmul.f32 %v502, %v456
      %v760 = vmul.f32 %v501, %v459
      %v761 = vmul.f32 %v502, %v459
      %v762 = vmul.f32 %v520, %v466
      %v763 = vmul.f32 %v521, %v466
      %v764 = vadd.f32 %v756, %v762
      %v765 = vadd.f32 %v757, %v763
      %v766 = vmul.f32 %v520, %v471
      %v767 = vmul.f32 %v521, %v471
      %v768 = vadd.f32 %v758, %v766
      %v769 = vadd.f32 %v759, %v767
      %v770 = vmul.f32 %v520, %v476
      %v771 = vmul.f32 %v521, %v476
      %v772 = vadd.f32 %v760, %v770
      %v773 = vadd.f32 %v761, %v771
      %v774 = vmul.f32 %v538, %v484
      %v775 = vmul.f32 %v539, %v484
      %v776 = vadd.f32 %v764, %v774
      %v777 = vadd.f32 %v765, %v775
      %v778 = vmul.f32 %v538, %v489
      %v779 = vmul.f32 %v539, %v489
      %v780 = vadd.f32 %v768, %v778
      %v781 = vadd.f32 %v769, %v779
      %v782 = vmul.f32 %v538, %v494
      %v783 = vmul.f32 %v539, %v494
      %v784 = vadd.f32 %v772, %v782
      %v785 = vadd.f32 %v773, %v783
      %v786 = vmul.f32 %v558, %v503
      %v787 = vmul.f32 %v559, %v503
      %v788 = vadd.f32 %v776, %v786
      %v789 = vadd.f32 %v777, %v787
      %v790 = vmul.f32 %v558, %v508
      %v791 = vmul.f32 %v559, %v508
      %v792 = vadd.f32 %v780, %v790
      %v793 = vadd.f32 %v781, %v791
      %v794 = vmul.f32 %v558, %v513
      %v795 = vmul.f32 %v559, %v513
      %v796 = vadd.f32 %v784, %v794
      %v797 = vadd.f32 %v785, %v795
      %v798 = vmul.f32 %v577, %v522
      %v799 = vmul.f32 %v578, %v522
      %v800 = vadd.f32 %v788, %v798
      %v801 = vadd.f32 %v789, %v799
      %v802 = vmul.f32 %v577, %v527
      %v803 = vmul.f32 %v578, %v527
      %v804 = vadd.f32 %v792, %v802
      %v805 = vadd.f32 %v793, %v803
      %v806 = vmul.f32 %v577, %v532
      %v807 = vmul.f32 %v578, %v532
      %v808 = vadd.f32 %v796, %v806
      %v809 = vadd.f32 %v797, %v807
      %v810 = vmul.f32 %v595, %v540
      %v811 = vmul.f32 %v596, %v540
      %v812 = vadd.f32 %v800, %v810
      %v813 = vadd.f32 %v801, %v811
      %v814 = vmul.f32 %v595, %v545
      %v815 = vmul.f32 %v596, %v545
      %v816 = vadd.f32 %v804, %v814
      %v817 = vadd.f32 %v805, %v815
      %v818 = vmul.f32 %v595, %v550
      %v819 = vmul.f32 %v596, %v550
      %v820 = vadd.f32 %v808, %v818
      %v821 = vadd.f32 %v809, %v819
      %s822 = sadd.s32 %s556, 512
      %s823 = scalar_lea.vmem [#allocation4], %s822
      %v824 = vld [vmem:[%s823] sm:$0xff]
      %v825 = vld [vmem:[%s823 + $0x8] sm:$0xff]
      %v826 = vmul.f32 %v824, %v560
      %v827 = vmul.f32 %v825, %v560
      %v828 = vadd.f32 %v812, %v826
      %v829 = vadd.f32 %v813, %v827
      %v830 = vmul.f32 %v824, %v565
      %v831 = vmul.f32 %v825, %v565
      %v832 = vadd.f32 %v816, %v830
      %v833 = vadd.f32 %v817, %v831
      %v834 = vmul.f32 %v824, %v570
      %v835 = vmul.f32 %v825, %v570
      %v836 = vadd.f32 %v820, %v834
      %v837 = vadd.f32 %v821, %v835
      %s838 = sadd.s32 %s556, 768
      %s839 = scalar_lea.vmem [#allocation4], %s838
      %v840 = vld [vmem:[%s839] sm:$0xff]
      %v841 = vld [vmem:[%s839 + $0x8] sm:$0xff]
      %v842 = vmul.f32 %v840, %v579
      %v843 = vmul.f32 %v841, %v579
      %v844 = vadd.f32 %v828, %v842
      %v845 = vadd.f32 %v829, %v843
      %v846 = vmul.f32 %v840, %v584
      %v847 = vmul.f32 %v841, %v584
      %v848 = vadd.f32 %v832, %v846
      %v849 = vadd.f32 %v833, %v847
      %v850 = vmul.f32 %v840, %v589
      %v851 = vmul.f32 %v841, %v589
      %v852 = vadd.f32 %v836, %v850
      %v853 = vadd.f32 %v837, %v851
      %s854 = scalar_lea.vmem [#allocation2], %s822
      %v855 = vld [vmem:[%s854] sm:$0xff]
      %v856 = vld [vmem:[%s854 + $0x8] sm:$0xff]
      %v857 = vmul.f32 %v855, %v597
      %v858 = vmul.f32 %v856, %v597
      %v859 = vadd.f32 %v844, %v857
      %v860 = vadd.f32 %v845, %v858
      %v861 = vmul.f32 %v855, %v602
      %v862 = vmul.f32 %v856, %v602
      %v863 = vadd.f32 %v848, %v861
      %v864 = vadd.f32 %v849, %v862
      %v865 = vmul.f32 %v855, %v607
      %v866 = vmul.f32 %v856, %v607
      %v867 = vadd.f32 %v852, %v865
      %v868 = vadd.f32 %v853, %v866
      %v869 = vadd.f32 %v859, %v612
      %v870 = vadd.f32 %v860, %v612
      %v871 = vmax.f32 %v869, 0.0
      %v872 = vmax.f32 %v870, 0.0
      %v873 = vmax.f32 %v742, %v871
      %v874 = vmax.f32 %v743, %v872
      %v875 = vadd.f32 %v863, %v617
      %v876 = vadd.f32 %v864, %v617
      %v877 = vmax.f32 %v875, 0.0
      %v878 = vmax.f32 %v876, 0.0
      %v879 = vmax.f32 %v748, %v877
      %v880 = vmax.f32 %v749, %v878
      %v881 = vadd.f32 %v867, %v622
      %v882 = vadd.f32 %v868, %v622
      %v883 = vmax.f32 %v881, 0.0
      %v884 = vmax.f32 %v882, 0.0
      %v885 = vmax.f32 %v754, %v883
      %v886 = vmax.f32 %v755, %v884
      %v887 = vmul.f32 %v520, %v453
      %v888 = vmul.f32 %v521, %v453
      %v889 = vmul.f32 %v520, %v456
      %v890 = vmul.f32 %v521, %v456
      %v891 = vmul.f32 %v520, %v459
      %v892 = vmul.f32 %v521, %v459
      %v893 = vmul.f32 %v538, %v466
      %v894 = vmul.f32 %v539, %v466
      %v895 = vadd.f32 %v887, %v893
      %v896 = vadd.f32 %v888, %v894
      %v897 = vmul.f32 %v538, %v471
      %v898 = vmul.f32 %v539, %v471
      %v899 = vadd.f32 %v889, %v897
      %v900 = vadd.f32 %v890, %v898
      %v901 = vmul.f32 %v538, %v476
      %v902 = vmul.f32 %v539, %v476
      %v903 = vadd.f32 %v891, %v901
      %v904 = vadd.f32 %v892, %v902
      %v905 = vmul.f32 %v685, %v484
      %v906 = vmul.f32 %v686, %v484
      %v907 = vadd.f32 %v895, %v905
      %v908 = vadd.f32 %v896, %v906
      %v909 = vmul.f32 %v685, %v489
      %v910 = vmul.f32 %v686, %v489
      %v911 = vadd.f32 %v899, %v909
      %v912 = vadd.f32 %v900, %v910
      %v913 = vmul.f32 %v685, %v494
      %v914 = vmul.f32 %v686, %v494
      %v915 = vadd.f32 %v903, %v913
      %v916 = vadd.f32 %v904, %v914
      %v917 = vmul.f32 %v577, %v503
      %v918 = vmul.f32 %v578, %v503
      %v919 = vadd.f32 %v907, %v917
      %v920 = vadd.f32 %v908, %v918
      %v921 = vmul.f32 %v577, %v508
      %v922 = vmul.f32 %v578, %v508
      %v923 = vadd.f32 %v911, %v921
      %v924 = vadd.f32 %v912, %v922
      %v925 = vmul.f32 %v577, %v513
      %v926 = vmul.f32 %v578, %v513
      %v927 = vadd.f32 %v915, %v925
      %v928 = vadd.f32 %v916, %v926
      %v929 = vmul.f32 %v595, %v522
      %v930 = vmul.f32 %v596, %v522
      %v931 = vadd.f32 %v919, %v929
      %v932 = vadd.f32 %v920, %v930
      %v933 = vmul.f32 %v595, %v527
      %v934 = vmul.f32 %v596, %v527
      %v935 = vadd.f32 %v923, %v933
      %v936 = vadd.f32 %v924, %v934
      %v937 = vmul.f32 %v595, %v532
      %v938 = vmul.f32 %v596, %v532
      %v939 = vadd.f32 %v927, %v937
      %v940 = vadd.f32 %v928, %v938
      %v941 = vmul.f32 %v724, %v540
      %v942 = vmul.f32 %v725, %v540
      %v943 = vadd.f32 %v931, %v941
      %v944 = vadd.f32 %v932, %v942
      %v945 = vmul.f32 %v724, %v545
      %v946 = vmul.f32 %v725, %v545
      %v947 = vadd.f32 %v935, %v945
      %v948 = vadd.f32 %v936, %v946
      %v949 = vmul.f32 %v724, %v550
      %v950 = vmul.f32 %v725, %v550
      %v951 = vadd.f32 %v939, %v949
      %v952 = vadd.f32 %v940, %v950
      %v953 = vmul.f32 %v840, %v560
      %v954 = vmul.f32 %v841, %v560
      %v955 = vadd.f32 %v943, %v953
      %v956 = vadd.f32 %v944, %v954
      %v957 = vmul.f32 %v840, %v565
      %v958 = vmul.f32 %v841, %v565
      %v959 = vadd.f32 %v947, %v957
      %v960 = vadd.f32 %v948, %v958
      %v961 = vmul.f32 %v840, %v570
      %v962 = vmul.f32 %v841, %v570
      %v963 = vadd.f32 %v951, %v961
      %v964 = vadd.f32 %v952, %v962
      %v965 = vmul.f32 %v855, %v579
      %v966 = vmul.f32 %v856, %v579
      %v967 = vadd.f32 %v955, %v965
      %v968 = vadd.f32 %v956, %v966
      %v969 = vmul.f32 %v855, %v584
      %v970 = vmul.f32 %v856, %v584
      %v971 = vadd.f32 %v959, %v969
      %v972 = vadd.f32 %v960, %v970
      %v973 = vmul.f32 %v855, %v589
      %v974 = vmul.f32 %v856, %v589
      %v975 = vadd.f32 %v963, %v973
      %v976 = vadd.f32 %v964, %v974
      %s977 = scalar_lea.vmem [#allocation2], %s838
      %v978 = vld [vmem:[%s977] sm:$0xff]
      %v979 = vld [vmem:[%s977 + $0x8] sm:$0xff]
      %v980 = vmul.f32 %v978, %v597
      %v981 = vmul.f32 %v979, %v597
      %v982 = vadd.f32 %v967, %v980
      %v983 = vadd.f32 %v968, %v981
      %v984 = vmul.f32 %v978, %v602
      %v985 = vmul.f32 %v979, %v602
      %v986 = vadd.f32 %v971, %v984
      %v987 = vadd.f32 %v972, %v985
      %v988 = vmul.f32 %v978, %v607
      %v989 = vmul.f32 %v979, %v607
      %v990 = vadd.f32 %v975, %v988
      %v991 = vadd.f32 %v976, %v989
      %v992 = vadd.f32 %v982, %v612
      %v993 = vadd.f32 %v983, %v612
      %v994 = vmax.f32 %v992, 0.0
      %v995 = vmax.f32 %v993, 0.0
      %v996 = vmax.f32 %v873, %v994
      %v997 = vmax.f32 %v874, %v995
      %v998 = vadd.f32 %v986, %v617
      %v999 = vadd.f32 %v987, %v617
      %v1000 = vmax.f32 %v998, 0.0
      %v1001 = vmax.f32 %v999, 0.0
      %v1002 = vmax.f32 %v879, %v1000
      %v1003 = vmax.f32 %v880, %v1001
      %v1004 = vadd.f32 %v990, %v622
      %v1005 = vadd.f32 %v991, %v622
      %v1006 = vmax.f32 %v1004, 0.0
      %v1007 = vmax.f32 %v1005, 0.0
      %v1008 = vmax.f32 %v885, %v1006
      %v1009 = vmax.f32 %v886, %v1007
      %s1010 = scalar_lea.vmem [#allocation3], %s449
      %1011 = vst [vmem:[%s1010] sm:$0xff] %v996
      %1012 = vst [vmem:[%s1010 + $0x8] sm:$0xff] %v997
      %s1013 = sadd.s32 %s444, 15
      %s1014 = smul.u32 %s1013, 16
      %s1015 = scalar_lea.vmem [#allocation3], %s1014
      %1016 = vst [vmem:[%s1015] sm:$0xff] %v1002
      %1017 = vst [vmem:[%s1015 + $0x8] sm:$0xff] %v1003
      %s1018 = sadd.s32 %s444, 30
      %s1019 = smul.u32 %s1018, 16
      %s1020 = scalar_lea.vmem [#allocation3], %s1019
      %1021 = vst [vmem:[%s1020] sm:$0xff] %v1008
      %1022 = vst [vmem:[%s1020 + $0x8] sm:$0xff] %v1009
    $region46: #{tpu_custom_call.1} parent=1 // loop_footer
      %s448 = sadd.s32 1, %s444
    $region47: #{tpu_custom_call.1} parent=1 // loop_footer_branch
      %443 = sbr.rel target = $region43
    $region48: #{tpu_custom_call.1} parent=1 // loop_exit
      _
    %v1023 = vld [vmem:[#allocation3] sm:$0xff]
    %v1024 = vld [vmem:[#allocation3 + $0x8] sm:$0xff]
    %v1025 = vld [vmem:[#allocation3 + $0x10] sm:$0xff]
    %v1026 = vld [vmem:[#allocation3 + $0x18] sm:$0xff]
    %v1027 = vld [vmem:[#allocation3 + $0x20] sm:$0xff]
    %v1028 = vld [vmem:[#allocation3 + $0x28] sm:$0xff]
    %v1029 = vld [vmem:[#allocation3 + $0x30] sm:$0xff]
    %v1030 = vld [vmem:[#allocation3 + $0x38] sm:$0xff]
    %v1031 = vld [vmem:[#allocation3 + $0x40] sm:$0xff]
    %v1032 = vld [vmem:[#allocation3 + $0x48] sm:$0xff]
    %v1033 = vld [vmem:[#allocation3 + $0x50] sm:$0xff]
    %v1034 = vld [vmem:[#allocation3 + $0x58] sm:$0xff]
    %v1035 = vld [vmem:[#allocation3 + $0x60] sm:$0xff]
    %v1036 = vld [vmem:[#allocation3 + $0x68] sm:$0xff]
    %v1037 = vld [vmem:[#allocation3 + $0x70] sm:$0xff]
    %v1038 = vld [vmem:[#allocation3 + $0x78] sm:$0xff]
    %v1039 = vld [vmem:[#allocation3 + $0x80] sm:$0xff]
    %v1040 = vld [vmem:[#allocation3 + $0x88] sm:$0xff]
    %v1041 = vld [vmem:[#allocation3 + $0x90] sm:$0xff]
    %v1042 = vld [vmem:[#allocation3 + $0x98] sm:$0xff]
    %v1043 = vld [vmem:[#allocation3 + $0xa0] sm:$0xff]
    %v1044 = vld [vmem:[#allocation3 + $0xa8] sm:$0xff]
    %v1045 = vld [vmem:[#allocation3 + $0xb0] sm:$0xff]
    %v1046 = vld [vmem:[#allocation3 + $0xb8] sm:$0xff]
    %v1047 = vld [vmem:[#allocation3 + $0xc0] sm:$0xff]
    %v1048 = vld [vmem:[#allocation3 + $0xc8] sm:$0xff]
    %v1049 = vld [vmem:[#allocation3 + $0xd0] sm:$0xff]
    %v1050 = vld [vmem:[#allocation3 + $0xd8] sm:$0xff]
    %v1051 = vld [vmem:[#allocation3 + $0xe0] sm:$0xff]
    %v1052 = vld [vmem:[#allocation3 + $0xe8] sm:$0xff]
    %v1053 = vld [vmem:[#allocation3 + $0xf0] sm:$0xff]
    %v1054 = vld [vmem:[#allocation3 + $0xf8] sm:$0xff]
    %v1055 = vld [vmem:[#allocation3 + $0x100] sm:$0xff]
    %v1056 = vld [vmem:[#allocation3 + $0x108] sm:$0xff]
    %v1057 = vld [vmem:[#allocation3 + $0x110] sm:$0xff]
    %v1058 = vld [vmem:[#allocation3 + $0x118] sm:$0xff]
    %v1059 = vld [vmem:[#allocation3 + $0x120] sm:$0xff]
    %v1060 = vld [vmem:[#allocation3 + $0x128] sm:$0xff]
    %v1061 = vld [vmem:[#allocation3 + $0x130] sm:$0xff]
    %v1062 = vld [vmem:[#allocation3 + $0x138] sm:$0xff]
    %v1063 = vld [vmem:[#allocation3 + $0x140] sm:$0xff]
    %v1064 = vld [vmem:[#allocation3 + $0x148] sm:$0xff]
    %v1065 = vld [vmem:[#allocation3 + $0x150] sm:$0xff]
    %v1066 = vld [vmem:[#allocation3 + $0x158] sm:$0xff]
    %v1067 = vld [vmem:[#allocation3 + $0x160] sm:$0xff]
    %v1068 = vld [vmem:[#allocation3 + $0x168] sm:$0xff]
    %v1069 = vld [vmem:[#allocation3 + $0x170] sm:$0xff]
    %v1070 = vld [vmem:[#allocation3 + $0x178] sm:$0xff]
    %v1071 = vld [vmem:[#allocation3 + $0x180] sm:$0xff]
    %v1072 = vld [vmem:[#allocation3 + $0x188] sm:$0xff]
    %v1073 = vld [vmem:[#allocation3 + $0x190] sm:$0xff]
    %v1074 = vld [vmem:[#allocation3 + $0x198] sm:$0xff]
    %v1075 = vld [vmem:[#allocation3 + $0x1a0] sm:$0xff]
    %v1076 = vld [vmem:[#allocation3 + $0x1a8] sm:$0xff]
    %v1077 = vld [vmem:[#allocation3 + $0x1b0] sm:$0xff]
    %v1078 = vld [vmem:[#allocation3 + $0x1b8] sm:$0xff]
    %v1079 = vld [vmem:[#allocation3 + $0x1c0] sm:$0xff]
    %v1080 = vld [vmem:[#allocation3 + $0x1c8] sm:$0xff]
    %v1081 = vld [vmem:[#allocation3 + $0x1d0] sm:$0xff]
    %v1082 = vld [vmem:[#allocation3 + $0x1d8] sm:$0xff]
    %v1083 = vld [vmem:[#allocation3 + $0x1e0] sm:$0xff]
    %v1084 = vld [vmem:[#allocation3 + $0x1e8] sm:$0xff]
    %v1085 = vld [vmem:[#allocation3 + $0x1f0] sm:$0xff]
    %v1086 = vld [vmem:[#allocation3 + $0x1f8] sm:$0xff]
    %v1087 = vld [vmem:[#allocation3 + $0x200] sm:$0xff]
    %v1088 = vld [vmem:[#allocation3 + $0x208] sm:$0xff]
    %v1089 = vld [vmem:[#allocation3 + $0x210] sm:$0xff]
    %v1090 = vld [vmem:[#allocation3 + $0x218] sm:$0xff]
    %v1091 = vld [vmem:[#allocation3 + $0x220] sm:$0xff]
    %v1092 = vld [vmem:[#allocation3 + $0x228] sm:$0xff]
    %v1093 = vld [vmem:[#allocation3 + $0x230] sm:$0xff]
    %v1094 = vld [vmem:[#allocation3 + $0x238] sm:$0xff]
    %v1095 = vld [vmem:[#allocation3 + $0x240] sm:$0xff]
    %v1096 = vld [vmem:[#allocation3 + $0x248] sm:$0xff]
    %v1097 = vld [vmem:[#allocation3 + $0x250] sm:$0xff]
    %v1098 = vld [vmem:[#allocation3 + $0x258] sm:$0xff]
    %v1099 = vld [vmem:[#allocation3 + $0x260] sm:$0xff]
    %v1100 = vld [vmem:[#allocation3 + $0x268] sm:$0xff]
    %v1101 = vld [vmem:[#allocation3 + $0x270] sm:$0xff]
    %v1102 = vld [vmem:[#allocation3 + $0x278] sm:$0xff]
    %v1103 = vld [vmem:[#allocation3 + $0x280] sm:$0xff]
    %v1104 = vld [vmem:[#allocation3 + $0x288] sm:$0xff]
    %v1105 = vld [vmem:[#allocation3 + $0x290] sm:$0xff]
    %v1106 = vld [vmem:[#allocation3 + $0x298] sm:$0xff]
    %v1107 = vld [vmem:[#allocation3 + $0x2a0] sm:$0xff]
    %v1108 = vld [vmem:[#allocation3 + $0x2a8] sm:$0xff]
    %v1109 = vld [vmem:[#allocation3 + $0x2b0] sm:$0xff]
    %v1110 = vld [vmem:[#allocation3 + $0x2b8] sm:$0xff]
    %v1111 = vld [vmem:[#allocation3 + $0x2c0] sm:$0xff]
    %v1112 = vld [vmem:[#allocation3 + $0x2c8] sm:$0xff]
    %v1113 = vld [vmem:[#allocation11] sm:$0xff]
    %v1114 = vld [vmem:[#allocation11 + $0x8] sm:$0xff]
    %v1115 = vld [vmem:[#allocation11 + $0x10] sm:$0xff]
    %v1116 = vld [vmem:[#allocation11 + $0x18] sm:$0xff]
    %v1117 = vld [vmem:[#allocation11 + $0x20] sm:$0xff]
    %v1118 = vld [vmem:[#allocation11 + $0x28] sm:$0xff]
    %v1119 = vld [vmem:[#allocation11 + $0x30] sm:$0x3]
    %v1120 = vld [vmem:[#allocation11 + $0x38] sm:$0x3]
    %v1121 = vld [vmem:[#allocation11 + $0x40] sm:$0x3]
    %v1122 = vld [vmem:[#allocation11 + $0x48] sm:$0x3]
    %v1123 = vld [vmem:[#allocation11 + $0x50] sm:$0x3]
    %v1124 = vld [vmem:[#allocation11 + $0x58] sm:$0x3]
    %v1125 = vld [vmem:[#allocation13] sm:$0xff]
    %v1126 = vld [vmem:[#allocation13 + $0x8] sm:$0x3]
    %vm1127 = vcmask 654336
    %v1129 = vsel %vm1127, %v1118, 0
    %v1132 = vsel %vm1127, %v1124, 0
    %1134 = vmatprep.subr.mxu0 0.0
    %1135 = vmatpush1.msra.mxu0 %v1023
    %1136 = vmatprep.subr.mxu0 0.0
    %1137 = vmatpush1.msra.mxu0 %v1024
    %1138 = vmatprep.subr.mxu0 0.0
    %1139 = vmatpush1.msra.mxu0 %v1025
    %1140 = vmatprep.subr.mxu0 0.0
    %1141 = vmatpush1.msra.mxu0 %v1026
    %1142 = vmatprep.subr.mxu0 0.0
    %1143 = vmatpush1.msra.mxu0 %v1027
    %1144 = vmatprep.subr.mxu0 0.0
    %1145 = vmatpush1.msra.mxu0 %v1028
    %1146 = vmatprep.subr.mxu0 0.0
    %1147 = vmatpush1.msra.mxu0 %v1029
    %1148 = vmatprep.subr.mxu0 0.0
    %1149 = vmatpush1.msra.mxu0 %v1030
    %1150 = vmatprep.subr.mxu0 0.0
    %1151 = vmatpush1.msra.mxu0 %v1031
    %1152 = vmatprep.subr.mxu0 0.0
    %1153 = vmatpush1.msra.mxu0 %v1032
    %1154 = vmatprep.subr.mxu0 0.0
    %1155 = vmatpush1.msra.mxu0 %v1033
    %1156 = vmatprep.subr.mxu0 0.0
    %1157 = vmatpush1.msra.mxu0 %v1034
    %1158 = vmatprep.subr.mxu0 0.0
    %1159 = vmatpush1.msra.mxu0 %v1035
    %1160 = vmatprep.subr.mxu0 0.0
    %1161 = vmatpush1.msra.mxu0 %v1036
    %1162 = vmatprep.subr.mxu0 0.0
    %1163 = vmatpush1.msra.mxu0 %v1037
    %1164 = vmatprep.subr.mxu0 0.0
    %1165 = vmatpush1.msra.mxu0 %v1038
    %1166 = vmatprep.subr.mxu0 0.0
    %1167 = vmatpush1.msra.mxu0 %v1039
    %1168 = vmatprep.subr.mxu0 0.0
    %1169 = vmatpush1.msra.mxu0 %v1040
    %1170 = vmatprep.subr.mxu0 0.0
    %1171 = vmatpush1.msra.mxu0 %v1041
    %1172 = vmatprep.subr.mxu0 0.0
    %1173 = vmatpush1.msra.mxu0 %v1042
    %1174 = vmatprep.subr.mxu0 0.0
    %1175 = vmatpush1.msra.mxu0 %v1043
    %1176 = vmatprep.subr.mxu0 0.0
    %1177 = vmatpush1.msra.mxu0 %v1044
    %1178 = vmatprep.subr.mxu0 0.0
    %1179 = vmatpush1.msra.mxu0 %v1045
    %1180 = vmatprep.subr.mxu0 0.0
    %1181 = vmatpush1.msra.mxu0 %v1046
    %1182 = vmatprep.subr.mxu0 0.0
    %1183 = vmatpush1.msra.mxu0 %v1047
    %1184 = vmatprep.subr.mxu0 0.0
    %1185 = vmatpush1.msra.mxu0 %v1048
    %1186 = vmatprep.subr.mxu0 0.0
    %1187 = vmatpush1.msra.mxu0 %v1049
    %1188 = vmatprep.subr.mxu0 0.0
    %1189 = vmatpush1.msra.mxu0 %v1050
    %1190 = vmatprep.subr.mxu0 0.0
    %1191 = vmatpush1.msra.mxu0 %v1051
    %1192 = vmatprep.subr.mxu0 0.0
    %1193 = vmatpush1.msra.mxu0 %v1052
    %1194 = vmatprep.subr.mxu0 0.0
    %1195 = vmatpush1.msra.mxu0 %v1053
    %1196 = vmatprep.subr.mxu0 0.0
    %1197 = vmatpush1.msra.mxu0 %v1054
    %1198 = vmatprep.mubr.f32.mxu0 %v1114
    %1199 = vmatmul.mubr.f32.gmra.mrb[0].mxu0 %v1113
    %v1200 = vpop.f32.mrb[0].mxu0
    %v1201 = vadd.f32 %v1125, %v1200
    %v1202 = vpop.f32.mrb[0].mxu0
    %1203 = vmatprep.mubr.f32.mxu0 %v1120
    %1204 = vmatmul.mubr.f32.gmra.mrb[0].mxu0 %v1119
    %v1205 = vpop.f32.mrb[0].mxu0
    %v1206 = vadd.f32 %v1126, %v1205
    %v1207 = vpop.f32.mrb[0].mxu0
    %1208 = vdwg.mxu0
    %1209 = vmatprep.subr.mxu0 0.0
    %1210 = vmatpush1.msra.mxu0 %v1055
    %1211 = vmatprep.subr.mxu0 0.0
    %1212 = vmatpush1.msra.mxu0 %v1056
    %1213 = vmatprep.subr.mxu0 0.0
    %1214 = vmatpush1.msra.mxu0 %v1057
    %1215 = vmatprep.subr.mxu0 0.0
    %1216 = vmatpush1.msra.mxu0 %v1058
    %1217 = vmatprep.subr.mxu0 0.0
    %1218 = vmatpush1.msra.mxu0 %v1059
    %1219 = vmatprep.subr.mxu0 0.0
    %1220 = vmatpush1.msra.mxu0 %v1060
    %1221 = vmatprep.subr.mxu0 0.0
    %1222 = vmatpush1.msra.mxu0 %v1061
    %1223 = vmatprep.subr.mxu0 0.0
    %1224 = vmatpush1.msra.mxu0 %v1062
    %1225 = vmatprep.subr.mxu0 0.0
    %1226 = vmatpush1.msra.mxu0 %v1063
    %1227 = vmatprep.subr.mxu0 0.0
    %1228 = vmatpush1.msra.mxu0 %v1064
    %1229 = vmatprep.subr.mxu0 0.0
    %1230 = vmatpush1.msra.mxu0 %v1065
    %1231 = vmatprep.subr.mxu0 0.0
    %1232 = vmatpush1.msra.mxu0 %v1066
    %1233 = vmatprep.subr.mxu0 0.0
    %1234 = vmatpush1.msra.mxu0 %v1067
    %1235 = vmatprep.subr.mxu0 0.0
    %1236 = vmatpush1.msra.mxu0 %v1068
    %1237 = vmatprep.subr.mxu0 0.0
    %1238 = vmatpush1.msra.mxu0 %v1069
    %1239 = vmatprep.subr.mxu0 0.0
    %1240 = vmatpush1.msra.mxu0 %v1070
    %1241 = vmatprep.subr.mxu0 0.0
    %1242 = vmatpush1.msra.mxu0 %v1071
    %1243 = vmatprep.subr.mxu0 0.0
    %1244 = vmatpush1.msra.mxu0 %v1072
    %1245 = vmatprep.subr.mxu0 0.0
    %1246 = vmatpush1.msra.mxu0 %v1073
    %1247 = vmatprep.subr.mxu0 0.0
    %1248 = vmatpush1.msra.mxu0 %v1074
    %1249 = vmatprep.subr.mxu0 0.0
    %1250 = vmatpush1.msra.mxu0 %v1075
    %1251 = vmatprep.subr.mxu0 0.0
    %1252 = vmatpush1.msra.mxu0 %v1076
    %1253 = vmatprep.subr.mxu0 0.0
    %1254 = vmatpush1.msra.mxu0 %v1077
    %1255 = vmatprep.subr.mxu0 0.0
    %1256 = vmatpush1.msra.mxu0 %v1078
    %1257 = vmatprep.subr.mxu0 0.0
    %1258 = vmatpush1.msra.mxu0 %v1079
    %1259 = vmatprep.subr.mxu0 0.0
    %1260 = vmatpush1.msra.mxu0 %v1080
    %1261 = vmatprep.subr.mxu0 0.0
    %1262 = vmatpush1.msra.mxu0 %v1081
    %1263 = vmatprep.subr.mxu0 0.0
    %1264 = vmatpush1.msra.mxu0 %v1082
    %1265 = vmatprep.subr.mxu0 0.0
    %1266 = vmatpush1.msra.mxu0 %v1083
    %1267 = vmatprep.subr.mxu0 0.0
    %1268 = vmatpush1.msra.mxu0 %v1084
    %1269 = vmatprep.subr.mxu0 0.0
    %1270 = vmatpush1.msra.mxu0 %v1085
    %1271 = vmatprep.subr.mxu0 0.0
    %1272 = vmatpush1.msra.mxu0 %v1086
    %1273 = vmatprep.mubr.f32.mxu0 %v1116
    %1274 = vmatmul.mubr.f32.gmra.mrb[0].mxu0 %v1115
    %v1275 = vpop.f32.mrb[0].mxu0
    %v1276 = vadd.f32 %v1201, %v1275
    %v1277 = vpop.f32.mrb[0].mxu0
    %1278 = vmatprep.mubr.f32.mxu0 %v1122
    %1279 = vmatmul.mubr.f32.gmra.mrb[0].mxu0 %v1121
    %v1280 = vpop.f32.mrb[0].mxu0
    %v1281 = vadd.f32 %v1206, %v1280
    %v1282 = vpop.f32.mrb[0].mxu0
    %1283 = vdwg.mxu0
    %1284 = vmatprep.subr.mxu0 0.0
    %1285 = vmatpush1.msra.mxu0 %v1087
    %1286 = vmatprep.subr.mxu0 0.0
    %1287 = vmatpush1.msra.mxu0 %v1088
    %1288 = vmatprep.subr.mxu0 0.0
    %1289 = vmatpush1.msra.mxu0 %v1089
    %1290 = vmatprep.subr.mxu0 0.0
    %1291 = vmatpush1.msra.mxu0 %v1090
    %1292 = vmatprep.subr.mxu0 0.0
    %1293 = vmatpush1.msra.mxu0 %v1091
    %1294 = vmatprep.subr.mxu0 0.0
    %1295 = vmatpush1.msra.mxu0 %v1092
    %1296 = vmatprep.subr.mxu0 0.0
    %1297 = vmatpush1.msra.mxu0 %v1093
    %1298 = vmatprep.subr.mxu0 0.0
    %1299 = vmatpush1.msra.mxu0 %v1094
    %1300 = vmatprep.subr.mxu0 0.0
    %1301 = vmatpush1.msra.mxu0 %v1095
    %1302 = vmatprep.subr.mxu0 0.0
    %1303 = vmatpush1.msra.mxu0 %v1096
    %1304 = vmatprep.subr.mxu0 0.0
    %1305 = vmatpush1.msra.mxu0 %v1097
    %1306 = vmatprep.subr.mxu0 0.0
    %1307 = vmatpush1.msra.mxu0 %v1098
    %1308 = vmatprep.subr.mxu0 0.0
    %1309 = vmatpush1.msra.mxu0 %v1099
    %1310 = vmatprep.subr.mxu0 0.0
    %1311 = vmatpush1.msra.mxu0 %v1100
    %1312 = vmatprep.subr.mxu0 0.0
    %1313 = vmatpush1.msra.mxu0 %v1101
    %1314 = vmatprep.subr.mxu0 0.0
    %1315 = vmatpush1.msra.mxu0 %v1102
    %1316 = vmatprep.subr.mxu0 0.0
    %1317 = vmatpush1.msra.mxu0 %v1103
    %1318 = vmatprep.subr.mxu0 0.0
    %1319 = vmatpush1.msra.mxu0 %v1104
    %1320 = vmatprep.subr.mxu0 0.0
    %1321 = vmatpush1.msra.mxu0 %v1105
    %1322 = vmatprep.subr.mxu0 0.0
    %1323 = vmatpush1.msra.mxu0 %v1106
    %1324 = vmatprep.subr.mxu0 0.0
    %1325 = vmatpush1.msra.mxu0 %v1107
    %1326 = vmatprep.subr.mxu0 0.0
    %1327 = vmatpush1.msra.mxu0 %v1108
    %1328 = vmatprep.subr.mxu0 0.0
    %1329 = vmatpush1.msra.mxu0 %v1109
    %1330 = vmatprep.subr.mxu0 0.0
    %1331 = vmatpush1.msra.mxu0 %v1110
    %1332 = vmatprep.subr.mxu0 0.0
    %1333 = vmatpush1.msra.mxu0 %v1111
    %1334 = vmatprep.subr.mxu0 0.0
    %1335 = vmatpush1.msra.mxu0 %v1112
    %1336 = vmatprep.subr.mxu0 0.0
    %1337 = vmatpush1.msra.mxu0 0.0
    %1338 = vmatprep.subr.mxu0 0.0
    %1339 = vmatpush1.msra.mxu0 0.0
    %1340 = vmatprep.subr.mxu0 0.0
    %1341 = vmatpush1.msra.mxu0 0.0
    %1342 = vmatprep.subr.mxu0 0.0
    %1343 = vmatpush1.msra.mxu0 0.0
    %1344 = vmatprep.subr.mxu0 0.0
    %1345 = vmatpush1.msra.mxu0 0.0
    %1346 = vmatprep.subr.mxu0 0.0
    %1347 = vmatpush1.msra.mxu0 0.0
    %1348 = vmatprep.mubr.f32.mxu0 %v1129
    %1349 = vmatmul.mubr.f32.gmra.mrb[0].mxu0 %v1117
    %v1350 = vpop.f32.mrb[0].mxu0
    %v1351 = vadd.f32 %v1276, %v1350
    %v1352 = vpop.f32.mrb[0].mxu0
    %1353 = vmatprep.mubr.f32.mxu0 %v1132
    %1354 = vmatmul.mubr.f32.gmra.mrb[0].mxu0 %v1123
    %v1355 = vpop.f32.mrb[0].mxu0
    %v1356 = vadd.f32 %v1281, %v1355
    %v1357 = vpop.f32.mrb[0].mxu0
    %1358 = vdwg.mxu0
    %1359 = vst [vmem:[#allocation14] sm:$0xff] %v1351
    %1360 = vst [vmem:[#allocation14 + $0x8] sm:$0x3] %v1356
    // Predicated region
    $region49: #{tpu_custom_call.1} parent=1 // pred_check
      _
    $region50: #{tpu_custom_call.1} parent=1 // pred_check_branch
      %1362 = sbr.rel (0) target = $region52
    $region51: #{tpu_custom_call.1} parent=1 // pred_region
      %s1364 = ssub.s32 256, 256
      %1365 = vsyncadd [#allocation6], %s1364
      %s1366 = sshll.u32 [#allocation14], 4
      %s1367 = int_to_ptr.vmem [resolvable:$true] %s1366
      %1372 = dma.vmem_to_hbm [thread:$0]  %s1367, 256, %s5, [#allocation6], 128, 128, 8
    $region52: #{tpu_custom_call.1} parent=1 // pred_fallthru
      _
    // Predicated region
    $region53: #{tpu_custom_call.1} parent=1 // pred_check
      _
    $region54: #{tpu_custom_call.1} parent=1 // pred_check_branch
      %1374 = sbr.rel (0) target = $region56
    $region55: #{tpu_custom_call.1} parent=1 // pred_region
      %1375 = dma.done [#allocation6], 256
    $region56: #{tpu_custom_call.1} parent=1 // pred_fallthru
      _
    %1376 = vsyncpa [#allocation5], 1
    %1377 = vsyncpa [#allocation12], 1
    %1378 = vsyncpa [#allocation6], 1
    %1379 = vsyncpa [#allocation7], 1
    %1380 = vsyncpa [#allocation10], 1

</llo_original>
